<compile_context>
chip_gen: v6e
topology: v6e:2x2x1
jax: 0.10.0
libtpu: 0.0.40
codegen_flags: <defaults>
</compile_context>

<pallas_src>
import functools
import math

import jax
import jax.numpy as jnp
from jax.experimental import pallas as pl
from jax.experimental.pallas import tpu as pltpu


# --------------------------------------------------------------------------------------
# Kernel
# --------------------------------------------------------------------------------------
def rrn_kernel(act_ref, w_ref, wl_ref, b_ref, out_ref, *,
               tb, n, f, o1, o_whid, o_w2f, o_w1gx, o_w1gm, o_w2g, o_w2o):
    f32, bf16 = jnp.float32, jnp.bfloat16
    rows = tb * n                                  # TB batches * N nodes in this block

    x = act_ref[0].astype(bf16)                    # (rows, 128), lanes >= DX are 0
    hid = act_ref[1].astype(bf16)                  # lanes >= H are 0
    h0 = act_ref[2].astype(bf16)                   # lanes >= D are 0
    c0 = act_ref[3]                                # f32, lanes >= D are 0

    b_hid, b_msg = b_ref[0:1], b_ref[1:2]
    b_g1, b_g2, b_out = b_ref[2:3], b_ref[3:4], b_ref[4:5]
    b_i, b_f, b_g, b_o = b_ref[5:6], b_ref[6:7], b_ref[7:8], b_ref[8:9]

    # ---- one fused MXU pass shared by the f-MLP pair projections and the o-MLP -------
    # columns: [0:F) hid@w1fa (+b1f) | [F:2F) hid@w1fb | [2F:2F+O1) hid@w1o (+b1o)
    pre_all = jnp.dot(hid, w_ref[o_whid:o_whid + 128, :],
                      preferred_element_type=f32) + b_hid                     # (rows,128)
    pre_a = pre_all[:, 0:f]                        # hid[b, j] @ w1fa + b1f
    pre_b = pre_all[:, f:2 * f]                    # hid[b, i] @ w1fb
    pre_o = pre_all[:, 2 * f:2 * f + o1]           # hid @ w1o + b1o

    # ---- pairwise concat realized as a VPU broadcast-add; torch row order (b*n+i)*n+j -
    pre1 = pre_a.reshape(tb, 1, n, f) + pre_b.reshape(tb, n, 1, f)            # (tb,i,j,F)
    hf = jnp.maximum(pre1, 0.0).reshape(rows * n, f).astype(bf16)
    msg = jnp.maximum(
        jnp.dot(hf, w_ref[o_w2f:o_w2f + f, :], preferred_element_type=f32) + b_msg,
        0.0)                                                                  # (rows*n,128)
    # TODO(synk): nn.Dropout(p=0.5) on messages is identity here (eval-mode kernel).
    # message-dim padded to 128 lanes -> full-vreg sublane reduction over j.
    sum_msg = jnp.sum(msg.reshape(rows, n, 128), axis=1)                      # (rows,128)

    # ---- g_mlp on concat([x, sum_msg]) (W1g split row-wise) --------------------------
    pre_g = (jnp.dot(x, w_ref[o_w1gx:o_w1gx + 128, :], preferred_element_type=f32)
             + jnp.dot(sum_msg.astype(bf16), w_ref[o_w1gm:o_w1gm + 128, :],
                       preferred_element_type=f32)
             + b_g1)
    hg = jnp.maximum(pre_g, 0.0).astype(bf16)
    input_g = jnp.maximum(
        jnp.dot(hg, w_ref[o_w2g:o_w2g + 128, :], preferred_element_type=f32) + b_g2,
        0.0)                                                                  # (rows,128)

    # ---- single-step LSTM (torch gate order i,f,g,o); each gate has its own 128 lanes -
    gates = (jnp.dot(input_g.astype(bf16), wl_ref[0], preferred_element_type=f32)
             + jnp.dot(h0, wl_ref[1], preferred_element_type=f32))           # (rows,512)
    i_g = jax.nn.sigmoid(gates[:, 0:128] + b_i)
    f_g = jax.nn.sigmoid(gates[:, 128:256] + b_f)
    g_g = jnp.tanh(gates[:, 256:384] + b_g)
    o_g = jax.nn.sigmoid(gates[:, 384:512] + b_o)
    c1 = f_g * c0 + i_g * g_g                      # pad lanes stay exactly 0
    h1 = o_g * jnp.tanh(c1)

    # ---- output MLP o(hidden) (single_output=False branch) ---------------------------
    ho = jnp.maximum(pre_o, 0.0).astype(bf16)
    out = jnp.maximum(
        jnp.dot(ho, w_ref[o_w2o:o_w2o + o1, :], preferred_element_type=f32) + b_out,
        0.0)                                                                  # (rows,128)

    # lane-dense single output slab: [out | h1 | c1]
    out_ref[0] = out
    out_ref[1] = h1
    out_ref[2] = c1


# --------------------------------------------------------------------------------------
# Parameter packing (done ONCE, outside the forward call)
# --------------------------------------------------------------------------------------
def pack_params(params, *, H, DX, M, F, D, O1, OUT):
    assert max(H, DX, M, D, O1, OUT) <= 128 and 2 * F + O1 <= 128
    f32 = jnp.float32

    # fused hid weight: cols [0:F)=w1fa, [F:2F)=w1fb, [2F:2F+O1)=w1o ; K padded to 128.
    w_hid = jnp.zeros((H, 128), f32)
    w_hid = w_hid.at[:, 0:F].set(params["w1fa"])
    w_hid = w_hid.at[:, F:2 * F].set(params["w1fb"])
    w_hid = w_hid.at[:, 2 * F:2 * F + O1].set(params["w1o"])

    # (name, true_K, matrix).  K=128 where the feeding activation is a 128-lane padded
    # slab (zero rows / zero lanes contribute nothing).
    blocks = [("whid", 128, w_hid), ("w2f", F, params["w2f"]),
              ("w1gx", 128, params["w1gx"]), ("w1gm", 128, params["w1gm"]),
              ("w2g", 128, params["w2g"]), ("w2o", O1, params["w2o"])]
    offsets, total = {}, 0
    for name, k, _ in blocks:
        offsets[name] = total
        total += ((k + 15) // 16) * 16             # bf16 sublane-tile aligned offsets
    w128 = jnp.zeros((total, 128), f32)
    for name, _, mat in blocks:
        o = offsets[name]
        w128 = w128.at[o:o + mat.shape[0], :mat.shape[1]].set(mat)
    w128 = w128.astype(jnp.bfloat16)

    # LSTM weights: gate g lives in lanes [g*128, g*128+D); K padded to 128.
    wl = jnp.zeros((2, 128, 512), f32)
    for g in range(4):
        wl = wl.at[0, :DX, g * 128:g * 128 + D].set(params["wih"][:, g * D:(g + 1) * D])
        wl = wl.at[1, :D, g * 128:g * 128 + D].set(params["whh"][:, g * D:(g + 1) * D])
    wl = wl.astype(jnp.bfloat16)

    # bias slab (f32): row 0 fused-hid bias [b1f|0|b1o|0], rows 5..8 combined LSTM bias.
    bias = jnp.zeros((16, 128), f32)
    bias = bias.at[0, 0:F].set(params["b1f"][0])
    bias = bias.at[0, 2 * F:2 * F + O1].set(params["b1o"][0])
    bias = bias.at[1, :M].set(params["b2f"][0])
    bias = bias.at[2, :F].set(params["b1g"][0])
    bias = bias.at[3, :DX].set(params["b2g"][0])
    bias = bias.at[4, :OUT].set(params["b2o"][0])
    blstm = (params["bih"] + params["bhh"])[0]
    for g in range(4):
        bias = bias.at[5 + g, :D].set(blstm[g * D:(g + 1) * D])

    return dict(w128=w128, wlstm=wl, bias=bias, offsets=offsets,
                dims=dict(H=H, DX=DX, M=M, F=F, D=D, O1=O1, OUT=OUT))


# --------------------------------------------------------------------------------------
# Block-count / VMEM heuristics
# --------------------------------------------------------------------------------------
def _vmem_capacity():
    try:
        return int(pltpu.get_tpu_info().vmem_capacity_bytes)
    except Exception:
        return None


def _choose_num_blocks(B, N, F):
    cap = _vmem_capacity() or (64 << 20)
    budget = cap // 3                              # headroom for double-buffered IO slabs
    # dominant per-batch VMEM: N^2-scaling pre1/hf/msg + a dozen (N,128) f32 intermediates
    per_batch = 4 * N * N * (2 * F + 256) + 4 * N * 128 * 24
    nb = max(B, 1)
    for d in range(1, B + 1):
        if B % d:
            continue
        tb = B // d
        if tb * per_batch <= budget and (d == 1 or (tb * N) % 8 == 0):
            nb = d
            break
    # Split into >=2 blocks (v7x megacore / DMA-compute overlap on v5e/v6e) only when
    # each block still gets substantial rows; tiny blocks are pure per-step overhead.
    if nb == 1 and B % 2 == 0 and (B // 2) * N >= 256 and ((B // 2) * N) % 8 == 0:
        nb = 2
    return nb


# --------------------------------------------------------------------------------------
# Forward wrapper
# --------------------------------------------------------------------------------------
def rrn_forward(x, hidden, h0, c0, packed, num_batch_blocks=None):
    dims, off = packed["dims"], packed["offsets"]
    F, O1, D, OUT = dims["F"], dims["O1"], dims["D"], dims["OUT"]
    B, N, DX = x.shape
    H = hidden.shape[2]

    if num_batch_blocks is None:
        num_batch_blocks = _choose_num_blocks(B, N, F)
    if B % num_batch_blocks != 0 or \
            (num_batch_blocks > 1 and ((B // num_batch_blocks) * N) % 8 != 0):
        num_batch_blocks = 1
    TB = B // num_batch_blocks
    R = TB * N

    def lane_pad(a):
        return jnp.pad(a, ((0, 0), (0, 128 - a.shape[1])))

    # single lane-dense activation slab: [x | hidden | h0 | c0], each padded to 128 lanes
    act = jnp.stack([lane_pad(x.reshape(B * N, DX)),
                     lane_pad(hidden.reshape(B * N, H)),
                     lane_pad(h0.reshape(B * N, D)),
                     lane_pad(c0.reshape(B * N, D))], axis=0)    # (4, B*N, 128) f32

    w128, wlstm, bias = packed["w128"], packed["wlstm"], packed["bias"]

    in_specs = [
        pl.BlockSpec((4, R, 128), lambda b: (0, b, 0)),
        pl.BlockSpec(w128.shape, lambda b: (0, 0)),
        pl.BlockSpec(wlstm.shape, lambda b: (0, 0, 0)),
        pl.BlockSpec(bias.shape, lambda b: (0, 0)),
    ]
    out_specs = pl.BlockSpec((3, R, 128), lambda b: (0, b, 0))
    out_shape = jax.ShapeDtypeStruct((3, B * N, 128), jnp.float32)

    flops = 2 * B * N * (128 * 128 + N * F * 128 + 3 * 128 * 128
                         + 2 * 128 * 512 + O1 * 128)
    transcendentals = B * N * 5 * 128
    bytes_accessed = int(act.size * 4 + w128.size * 2 + wlstm.size * 2
                         + bias.size * 4 + 3 * B * N * 128 * 4)

    cap = _vmem_capacity()
    vmem_limit = None if cap is None else int(min(cap * 3 // 4, 112 << 20))

    kern = functools.partial(
        rrn_kernel, tb=TB, n=N, f=F, o1=O1,
        o_whid=off["whid"], o_w2f=off["w2f"], o_w1gx=off["w1gx"],
        o_w1gm=off["w1gm"], o_w2g=off["w2g"], o_w2o=off["w2o"])

    slab = pl.pallas_call(
        kern,
        out_shape=out_shape,
        grid=(num_batch_blocks,),
        in_specs=in_specs,
        out_specs=out_specs,
        compiler_params=pltpu.CompilerParams(
            dimension_semantics=("parallel",), vmem_limit_bytes=vmem_limit),
        cost_estimate=pl.CostEstimate(flops=int(flops),
                                      transcendentals=int(transcendentals),
                                      bytes_accessed=bytes_accessed),
    )(act, w128, wlstm, bias)

    out = slab[0, :, :OUT].reshape(B, N, OUT)
    h1 = slab[1, :, :D]
    c1 = slab[2, :, :D]
    out_g = h1.reshape(B, N, D)                    # single-layer single-step LSTM: out_g == h1
    return out, out_g, h1[None], c1[None]


# --------------------------------------------------------------------------------------
# Init + pure-JAX reference (mirrors the torch forward, eval mode)
# --------------------------------------------------------------------------------------
def init_params(key, H, DX, M, F, D, O1, OUT):
    shapes = {
        "w1fa": (H, F), "w1fb": (H, F), "b1f": (1, F),
        "w2f": (F, M), "b2f": (1, M),
        "w1gx": (DX, F), "w1gm": (M, F), "b1g": (1, F),
        "w2g": (F, DX), "b2g": (1, DX),
        "wih": (DX, 4 * D), "whh": (D, 4 * D), "bih": (1, 4 * D), "bhh": (1, 4 * D),
        "w1o": (D, O1), "b1o": (1, O1),
        "w2o": (O1, OUT), "b2o": (1, OUT),
    }
    keys = jax.random.split(key, len(shapes))
    params = {}
    for k, (name, shape) in zip(keys, shapes.items()):
        fan_in = shape[0] if name.startswith("w") else shape[1]
        bound = 1.0 / math.sqrt(max(fan_in, 1))
        params[name] = jax.random.uniform(k, shape, jnp.float32, -bound, bound)
    return params


def rrn_reference(x, hidden, h0, c0, p):
    """Pure-JAX reference mirroring the torch forward (eval mode); matmuls in bf16 with
    f32 accumulation to match the kernel's MXU precision contract."""
    bf16, f32 = jnp.bfloat16, jnp.float32

    def mm(a, w):
        return jnp.dot(a.astype(bf16), w.astype(bf16), preferred_element_type=f32)

    B, N, H = hidden.shape
    D = h0.shape[2]
    hi = jnp.tile(hidden, (1, N, 1))                 # hi[b,k] = hidden[b, k % N]
    hj = jnp.repeat(hidden, N, axis=1)               # hj[b,k] = hidden[b, k // N]
    inp_f = jnp.concatenate([hi, hj], axis=2)
    W1f = jnp.concatenate([p["w1fa"], p["w1fb"]], axis=0)
    hf = jax.nn.relu(mm(inp_f, W1f) + p["b1f"])
    msg = jax.nn.relu(mm(hf, p["w2f"]) + p["b2f"])
    sum_msg = msg.reshape(B, N, N, -1).sum(axis=2)
    inp_g = jnp.concatenate([x, sum_msg], axis=2)
    W1g = jnp.concatenate([p["w1gx"], p["w1gm"]], axis=0)
    hg = jax.nn.relu(mm(inp_g, W1g) + p["b1g"])
    input_g = jax.nn.relu(mm(hg, p["w2g"]) + p["b2g"])
    ig = input_g.reshape(B * N, -1)
    gates = mm(ig, p["wih"]) + p["bih"] + mm(h0[0], p["whh"]) + p["bhh"]
    i_g = jax.nn.sigmoid(gates[:, :D])
    f_g = jax.nn.sigmoid(gates[:, D:2 * D])
    g_g = jnp.tanh(gates[:, 2 * D:3 * D])
    o_g = jax.nn.sigmoid(gates[:, 3 * D:])
    c1 = f_g * c0[0] + i_g * g_g
    h1 = o_g * jnp.tanh(c1)
    out_g = h1.reshape(B, N, D)
    ho = jax.nn.relu(mm(hidden, p["w1o"]) + p["b1o"])
    out = jax.nn.relu(mm(ho, p["w2o"]) + p["b2o"])
    return out, out_g, h1[None], c1[None]


if __name__ == "__main__":
    # Small shapes consistent with the module's forward.
    B, N = 2, 8          # batch, n_facts
    H = D = 32           # hidden_dim_lstm == dim_hidden
    DX = 32              # hidden_dims_mlp[-1]
    M = 16               # message_dim
    F = 32               # f_dims (single hidden layer)
    O1 = 32              # o_dims (single hidden layer)
    OUT = 8              # output_dim

    key = jax.random.PRNGKey(0)
    k_x, k_h, k_h0, k_c0, k_p = jax.random.split(key, 5)
    x = jax.random.normal(k_x, (B, N, DX), jnp.float32)
    hidden = jax.random.normal(k_h, (B, N, H), jnp.float32)
    h0 = 0.1 * jax.random.normal(k_h0, (1, B * N, D), jnp.float32)
    c0 = 0.1 * jax.random.normal(k_c0, (1, B * N, D), jnp.float32)

    params = init_params(k_p, H, DX, M, F, D, O1, OUT)
    packed = pack_params(params, H=H, DX=DX, M=M, F=F, D=D, O1=O1, OUT=OUT)
    jax.block_until_ready((packed["w128"], packed["wlstm"], packed["bias"]))

    out, out_g, h1, c1 = rrn_forward(x, hidden, h0, c0, packed)
    jax.block_until_ready((out, out_g, h1, c1))

    ref = rrn_reference(x, hidden, h0, c0, params)
    for name, got, want in zip(("out", "out_g", "h", "c"), (out, out_g, h1, c1), ref):
        assert got.shape == want.shape, (name, got.shape, want.shape)
        assert jnp.allclose(got, want, rtol=2e-2, atol=2e-2), f"kernel/reference mismatch: {name}"

    print("KERNEL_OK")
</pallas_src>

<mosaic_0001>
module attributes {stable_mosaic.version = 11 : i64} {
  func.func @rrn_kernel(%arg0: i32, %arg1: memref<4x16x128xf32, #tpu.memory_space<vmem>>, %arg2: memref<576x128xbf16, #tpu.memory_space<vmem>>, %arg3: memref<2x128x512xbf16, #tpu.memory_space<vmem>>, %arg4: memref<16x128xf32, #tpu.memory_space<vmem>>, %arg5: memref<3x16x128xf32, #tpu.memory_space<vmem>>) attributes {dimension_semantics = [#tpu.dimension_semantics<parallel>], iteration_bounds = array<i64: 1>, scalar_prefetch = 0 : i64, scratch_operands = 0 : i64, tpu.core_type = #tpu.core_type<tc>, window_params = [{transform_indices = @transform_0, window_bounds = array<i64: 4, 16, 128>}, {pipeline_mode = #tpu.pipeline_mode<synchronous>, transform_indices = @transform_1, window_bounds = array<i64: 576, 128>}, {pipeline_mode = #tpu.pipeline_mode<synchronous>, transform_indices = @transform_2, window_bounds = array<i64: 2, 128, 512>}, {pipeline_mode = #tpu.pipeline_mode<synchronous>, transform_indices = @transform_3, window_bounds = array<i64: 16, 128>}, {transform_indices = @transform_4, window_bounds = array<i64: 3, 16, 128>}]} {
    %c0 = arith.constant 0 : index
    %c0_0 = arith.constant 0 : index
    %c0_1 = arith.constant 0 : index
    %0 = vector.load %arg1[%c0, %c0_0, %c0_1] : memref<4x16x128xf32, #tpu.memory_space<vmem>>, vector<1x16x128xf32>
    %1 = vector.shape_cast %0 : vector<1x16x128xf32> to vector<16x128xf32>
    %2 = arith.truncf %1 : vector<16x128xf32> to vector<16x128xbf16>
    %c1 = arith.constant 1 : index
    %c0_2 = arith.constant 0 : index
    %c0_3 = arith.constant 0 : index
    %3 = vector.load %arg1[%c1, %c0_2, %c0_3] : memref<4x16x128xf32, #tpu.memory_space<vmem>>, vector<1x16x128xf32>
    %4 = vector.shape_cast %3 : vector<1x16x128xf32> to vector<16x128xf32>
    %5 = arith.truncf %4 : vector<16x128xf32> to vector<16x128xbf16>
    %c2 = arith.constant 2 : index
    %c0_4 = arith.constant 0 : index
    %c0_5 = arith.constant 0 : index
    %6 = vector.load %arg1[%c2, %c0_4, %c0_5] : memref<4x16x128xf32, #tpu.memory_space<vmem>>, vector<1x16x128xf32>
    %7 = vector.shape_cast %6 : vector<1x16x128xf32> to vector<16x128xf32>
    %8 = arith.truncf %7 : vector<16x128xf32> to vector<16x128xbf16>
    %c3 = arith.constant 3 : index
    %c0_6 = arith.constant 0 : index
    %c0_7 = arith.constant 0 : index
    %9 = vector.load %arg1[%c3, %c0_6, %c0_7] : memref<4x16x128xf32, #tpu.memory_space<vmem>>, vector<1x16x128xf32>
    %10 = vector.shape_cast %9 : vector<1x16x128xf32> to vector<16x128xf32>
    %c0_8 = arith.constant 0 : index
    %c0_9 = arith.constant 0 : index
    %11 = vector.load %arg4[%c0_8, %c0_9] : memref<16x128xf32, #tpu.memory_space<vmem>>, vector<1x128xf32>
    %c1_10 = arith.constant 1 : index
    %c0_11 = arith.constant 0 : index
    %12 = vector.load %arg4[%c1_10, %c0_11] : memref<16x128xf32, #tpu.memory_space<vmem>>, vector<1x128xf32>
    %c2_12 = arith.constant 2 : index
    %c0_13 = arith.constant 0 : index
    %13 = vector.load %arg4[%c2_12, %c0_13] : memref<16x128xf32, #tpu.memory_space<vmem>>, vector<1x128xf32>
    %c3_14 = arith.constant 3 : index
    %c0_15 = arith.constant 0 : index
    %14 = vector.load %arg4[%c3_14, %c0_15] : memref<16x128xf32, #tpu.memory_space<vmem>>, vector<1x128xf32>
    %c4 = arith.constant 4 : index
    %c0_16 = arith.constant 0 : index
    %15 = vector.load %arg4[%c4, %c0_16] : memref<16x128xf32, #tpu.memory_space<vmem>>, vector<1x128xf32>
    %c5 = arith.constant 5 : index
    %c0_17 = arith.constant 0 : index
    %16 = vector.load %arg4[%c5, %c0_17] : memref<16x128xf32, #tpu.memory_space<vmem>>, vector<1x128xf32>
    %c6 = arith.constant 6 : index
    %c0_18 = arith.constant 0 : index
    %17 = vector.load %arg4[%c6, %c0_18] : memref<16x128xf32, #tpu.memory_space<vmem>>, vector<1x128xf32>
    %c7 = arith.constant 7 : index
    %c0_19 = arith.constant 0 : index
    %18 = vector.load %arg4[%c7, %c0_19] : memref<16x128xf32, #tpu.memory_space<vmem>>, vector<1x128xf32>
    %c8 = arith.constant 8 : index
    %c0_20 = arith.constant 0 : index
    %19 = vector.load %arg4[%c8, %c0_20] : memref<16x128xf32, #tpu.memory_space<vmem>>, vector<1x128xf32>
    %c0_21 = arith.constant 0 : index
    %c0_22 = arith.constant 0 : index
    %20 = vector.load %arg2[%c0_21, %c0_22] : memref<576x128xbf16, #tpu.memory_space<vmem>>, vector<128x128xbf16>
    %cst = arith.constant dense<0.000000e+00> : vector<16x128xf32>
    %21 = tpu.matmul %5, %20, %cst {dimension_numbers = #tpu.dot_dimension_numbers<[1], [0], [0], [1], [0, 0, 1, 1], [], []>} : vector<16x128xbf16>, vector<128x128xbf16>, vector<16x128xf32> -> vector<16x128xf32>
    %22 = vector.broadcast %11 : vector<1x128xf32> to vector<16x128xf32>
    %23 = arith.addf %21, %22 : vector<16x128xf32>
    %24 = vector.extract_strided_slice %23 {offsets = [0, 0], sizes = [16, 32], strides = [1, 1]} : vector<16x128xf32> to vector<16x32xf32>
    %25 = vector.extract_strided_slice %23 {offsets = [0, 32], sizes = [16, 32], strides = [1, 1]} : vector<16x128xf32> to vector<16x32xf32>
    %26 = vector.extract_strided_slice %23 {offsets = [0, 64], sizes = [16, 32], strides = [1, 1]} : vector<16x128xf32> to vector<16x32xf32>
    %27 = vector.shape_cast %24 : vector<16x32xf32> to vector<2x1x8x32xf32>
    %28 = vector.shape_cast %25 : vector<16x32xf32> to vector<2x8x1x32xf32>
    %29 = vector.broadcast %27 : vector<2x1x8x32xf32> to vector<2x8x8x32xf32>
    %30 = vector.broadcast %28 : vector<2x8x1x32xf32> to vector<2x8x8x32xf32>
    %31 = arith.addf %29, %30 : vector<2x8x8x32xf32>
    %cst_23 = arith.constant 0.000000e+00 : f32
    %32 = vector.broadcast %cst_23 : f32 to vector<2x8x8x32xf32>
    %33 = arith.maximumf %31, %32 : vector<2x8x8x32xf32>
    %34 = vector.shape_cast %33 : vector<2x8x8x32xf32> to vector<128x32xf32>
    %35 = arith.truncf %34 : vector<128x32xf32> to vector<128x32xbf16>
    %c128 = arith.constant 128 : index
    %c0_24 = arith.constant 0 : index
    %36 = vector.load %arg2[%c128, %c0_24] : memref<576x128xbf16, #tpu.memory_space<vmem>>, vector<32x128xbf16>
    %cst_25 = arith.constant dense<0.000000e+00> : vector<128x128xf32>
    %37 = tpu.matmul %35, %36, %cst_25 {dimension_numbers = #tpu.dot_dimension_numbers<[1], [0], [0], [1], [0, 0, 1, 1], [], []>} : vector<128x32xbf16>, vector<32x128xbf16>, vector<128x128xf32> -> vector<128x128xf32>
    %38 = vector.broadcast %12 : vector<1x128xf32> to vector<128x128xf32>
    %39 = arith.addf %37, %38 : vector<128x128xf32>
    %cst_26 = arith.constant 0.000000e+00 : f32
    %40 = vector.broadcast %cst_26 : f32 to vector<128x128xf32>
    %41 = arith.maximumf %39, %40 : vector<128x128xf32>
    %42 = vector.shape_cast %41 : vector<128x128xf32> to vector<16x8x128xf32>
    %cst_27 = arith.constant dense<0.000000e+00> : vector<16x128xf32>
    %43 = vector.multi_reduction <add>, %42, %cst_27 [1] : vector<16x8x128xf32> to vector<16x128xf32>
    %c160 = arith.constant 160 : index
    %c0_28 = arith.constant 0 : index
    %44 = vector.load %arg2[%c160, %c0_28] : memref<576x128xbf16, #tpu.memory_space<vmem>>, vector<128x128xbf16>
    %cst_29 = arith.constant dense<0.000000e+00> : vector<16x128xf32>
    %45 = tpu.matmul %2, %44, %cst_29 {dimension_numbers = #tpu.dot_dimension_numbers<[1], [0], [0], [1], [0, 0, 1, 1], [], []>} : vector<16x128xbf16>, vector<128x128xbf16>, vector<16x128xf32> -> vector<16x128xf32>
    %46 = arith.truncf %43 : vector<16x128xf32> to vector<16x128xbf16>
    %c288 = arith.constant 288 : index
    %c0_30 = arith.constant 0 : index
    %47 = vector.load %arg2[%c288, %c0_30] : memref<576x128xbf16, #tpu.memory_space<vmem>>, vector<128x128xbf16>
    %cst_31 = arith.constant dense<0.000000e+00> : vector<16x128xf32>
    %48 = tpu.matmul %46, %47, %cst_31 {dimension_numbers = #tpu.dot_dimension_numbers<[1], [0], [0], [1], [0, 0, 1, 1], [], []>} : vector<16x128xbf16>, vector<128x128xbf16>, vector<16x128xf32> -> vector<16x128xf32>
    %49 = arith.addf %45, %48 : vector<16x128xf32>
    %50 = vector.broadcast %13 : vector<1x128xf32> to vector<16x128xf32>
    %51 = arith.addf %49, %50 : vector<16x128xf32>
    %cst_32 = arith.constant 0.000000e+00 : f32
    %52 = vector.broadcast %cst_32 : f32 to vector<16x128xf32>
    %53 = arith.maximumf %51, %52 : vector<16x128xf32>
    %54 = arith.truncf %53 : vector<16x128xf32> to vector<16x128xbf16>
    %c416 = arith.constant 416 : index
    %c0_33 = arith.constant 0 : index
    %55 = vector.load %arg2[%c416, %c0_33] : memref<576x128xbf16, #tpu.memory_space<vmem>>, vector<128x128xbf16>
    %cst_34 = arith.constant dense<0.000000e+00> : vector<16x128xf32>
    %56 = tpu.matmul %54, %55, %cst_34 {dimension_numbers = #tpu.dot_dimension_numbers<[1], [0], [0], [1], [0, 0, 1, 1], [], []>} : vector<16x128xbf16>, vector<128x128xbf16>, vector<16x128xf32> -> vector<16x128xf32>
    %57 = vector.broadcast %14 : vector<1x128xf32> to vector<16x128xf32>
    %58 = arith.addf %56, %57 : vector<16x128xf32>
    %cst_35 = arith.constant 0.000000e+00 : f32
    %59 = vector.broadcast %cst_35 : f32 to vector<16x128xf32>
    %60 = arith.maximumf %58, %59 : vector<16x128xf32>
    %61 = arith.truncf %60 : vector<16x128xf32> to vector<16x128xbf16>
    %c0_36 = arith.constant 0 : index
    %c0_37 = arith.constant 0 : index
    %c0_38 = arith.constant 0 : index
    %62 = vector.load %arg3[%c0_36, %c0_37, %c0_38] : memref<2x128x512xbf16, #tpu.memory_space<vmem>>, vector<1x128x512xbf16>
    %63 = vector.shape_cast %62 : vector<1x128x512xbf16> to vector<128x512xbf16>
    %cst_39 = arith.constant dense<0.000000e+00> : vector<16x512xf32>
    %64 = tpu.matmul %61, %63, %cst_39 {dimension_numbers = #tpu.dot_dimension_numbers<[1], [0], [0], [1], [0, 0, 1, 1], [], []>} : vector<16x128xbf16>, vector<128x512xbf16>, vector<16x512xf32> -> vector<16x512xf32>
    %c1_40 = arith.constant 1 : index
    %c0_41 = arith.constant 0 : index
    %c0_42 = arith.constant 0 : index
    %65 = vector.load %arg3[%c1_40, %c0_41, %c0_42] : memref<2x128x512xbf16, #tpu.memory_space<vmem>>, vector<1x128x512xbf16>
    %66 = vector.shape_cast %65 : vector<1x128x512xbf16> to vector<128x512xbf16>
    %cst_43 = arith.constant dense<0.000000e+00> : vector<16x512xf32>
    %67 = tpu.matmul %8, %66, %cst_43 {dimension_numbers = #tpu.dot_dimension_numbers<[1], [0], [0], [1], [0, 0, 1, 1], [], []>} : vector<16x128xbf16>, vector<128x512xbf16>, vector<16x512xf32> -> vector<16x512xf32>
    %68 = arith.addf %64, %67 : vector<16x512xf32>
    %69 = vector.extract_strided_slice %68 {offsets = [0, 0], sizes = [16, 128], strides = [1, 1]} : vector<16x512xf32> to vector<16x128xf32>
    %70 = vector.broadcast %16 : vector<1x128xf32> to vector<16x128xf32>
    %71 = arith.addf %69, %70 : vector<16x128xf32>
    %72 = arith.negf %71 : vector<16x128xf32>
    %73 = math.exp %72 : vector<16x128xf32>
    %cst_44 = arith.constant 1.000000e+00 : f32
    %74 = vector.broadcast %cst_44 : f32 to vector<16x128xf32>
    %75 = arith.addf %74, %73 : vector<16x128xf32>
    %76 = arith.divf %74, %75 : vector<16x128xf32>
    %77 = vector.extract_strided_slice %68 {offsets = [0, 128], sizes = [16, 128], strides = [1, 1]} : vector<16x512xf32> to vector<16x128xf32>
    %78 = vector.broadcast %17 : vector<1x128xf32> to vector<16x128xf32>
    %79 = arith.addf %77, %78 : vector<16x128xf32>
    %80 = arith.negf %79 : vector<16x128xf32>
    %81 = math.exp %80 : vector<16x128xf32>
    %cst_45 = arith.constant 1.000000e+00 : f32
    %82 = vector.broadcast %cst_45 : f32 to vector<16x128xf32>
    %83 = arith.addf %82, %81 : vector<16x128xf32>
    %84 = arith.divf %82, %83 : vector<16x128xf32>
    %85 = vector.extract_strided_slice %68 {offsets = [0, 256], sizes = [16, 128], strides = [1, 1]} : vector<16x512xf32> to vector<16x128xf32>
    %86 = vector.broadcast %18 : vector<1x128xf32> to vector<16x128xf32>
    %87 = arith.addf %85, %86 : vector<16x128xf32>
    %88 = math.tanh %87 : vector<16x128xf32>
    %89 = vector.extract_strided_slice %68 {offsets = [0, 384], sizes = [16, 128], strides = [1, 1]} : vector<16x512xf32> to vector<16x128xf32>
    %90 = vector.broadcast %19 : vector<1x128xf32> to vector<16x128xf32>
    %91 = arith.addf %89, %90 : vector<16x128xf32>
    %92 = arith.negf %91 : vector<16x128xf32>
    %93 = math.exp %92 : vector<16x128xf32>
    %cst_46 = arith.constant 1.000000e+00 : f32
    %94 = vector.broadcast %cst_46 : f32 to vector<16x128xf32>
    %95 = arith.addf %94, %93 : vector<16x128xf32>
    %96 = arith.divf %94, %95 : vector<16x128xf32>
    %97 = arith.mulf %84, %10 : vector<16x128xf32>
    %98 = arith.mulf %76, %88 : vector<16x128xf32>
    %99 = arith.addf %97, %98 : vector<16x128xf32>
    %100 = math.tanh %99 : vector<16x128xf32>
    %101 = arith.mulf %96, %100 : vector<16x128xf32>
    %cst_47 = arith.constant 0.000000e+00 : f32
    %102 = vector.broadcast %cst_47 : f32 to vector<16x32xf32>
    %103 = arith.maximumf %26, %102 : vector<16x32xf32>
    %104 = arith.truncf %103 : vector<16x32xf32> to vector<16x32xbf16>
    %c544 = arith.constant 544 : index
    %c0_48 = arith.constant 0 : index
    %105 = vector.load %arg2[%c544, %c0_48] : memref<576x128xbf16, #tpu.memory_space<vmem>>, vector<32x128xbf16>
    %cst_49 = arith.constant dense<0.000000e+00> : vector<16x128xf32>
    %106 = tpu.matmul %104, %105, %cst_49 {dimension_numbers = #tpu.dot_dimension_numbers<[1], [0], [0], [1], [0, 0, 1, 1], [], []>} : vector<16x32xbf16>, vector<32x128xbf16>, vector<16x128xf32> -> vector<16x128xf32>
    %107 = vector.broadcast %15 : vector<1x128xf32> to vector<16x128xf32>
    %108 = arith.addf %106, %107 : vector<16x128xf32>
    %cst_50 = arith.constant 0.000000e+00 : f32
    %109 = vector.broadcast %cst_50 : f32 to vector<16x128xf32>
    %110 = arith.maximumf %108, %109 : vector<16x128xf32>
    %c0_51 = arith.constant 0 : index
    %c0_52 = arith.constant 0 : index
    %c0_53 = arith.constant 0 : index
    %111 = vector.load %arg5[%c0_51, %c0_52, %c0_53] : memref<3x16x128xf32, #tpu.memory_space<vmem>>, vector<1x16x128xf32>
    %112 = vector.shape_cast %111 : vector<1x16x128xf32> to vector<16x128xf32>
    %113 = vector.shape_cast %110 : vector<16x128xf32> to vector<1x16x128xf32>
    tpu.vector_store %arg5[%c0_51, %c0_52, %c0_53], %113 {strides = array<i32>} : memref<3x16x128xf32, #tpu.memory_space<vmem>>, vector<1x16x128xf32>,
    %c1_54 = arith.constant 1 : index
    %c0_55 = arith.constant 0 : index
    %c0_56 = arith.constant 0 : index
    %114 = vector.load %arg5[%c1_54, %c0_55, %c0_56] : memref<3x16x128xf32, #tpu.memory_space<vmem>>, vector<1x16x128xf32>
    %115 = vector.shape_cast %114 : vector<1x16x128xf32> to vector<16x128xf32>
    %116 = vector.shape_cast %101 : vector<16x128xf32> to vector<1x16x128xf32>
    tpu.vector_store %arg5[%c1_54, %c0_55, %c0_56], %116 {strides = array<i32>} : memref<3x16x128xf32, #tpu.memory_space<vmem>>, vector<1x16x128xf32>,
    %c2_57 = arith.constant 2 : index
    %c0_58 = arith.constant 0 : index
    %c0_59 = arith.constant 0 : index
    %117 = vector.load %arg5[%c2_57, %c0_58, %c0_59] : memref<3x16x128xf32, #tpu.memory_space<vmem>>, vector<1x16x128xf32>
    %118 = vector.shape_cast %117 : vector<1x16x128xf32> to vector<16x128xf32>
    %119 = vector.shape_cast %99 : vector<16x128xf32> to vector<1x16x128xf32>
    tpu.vector_store %arg5[%c2_57, %c0_58, %c0_59], %119 {strides = array<i32>} : memref<3x16x128xf32, #tpu.memory_space<vmem>>, vector<1x16x128xf32>,
    return
  }
  func.func @transform_0(%arg0: i32) -> (i32, i32, i32) {
    %c0_i32 = arith.constant 0 : i32
    %c0_i32_0 = arith.constant 0 : i32
    %c0_i32_1 = arith.constant 0 : i32
    return %c0_i32, %arg0, %c0_i32_0 : i32, i32, i32
  }
  func.func @transform_1(%arg0: i32) -> (i32, i32) {
    %c0_i32 = arith.constant 0 : i32
    %c0_i32_0 = arith.constant 0 : i32
    %c0_i32_1 = arith.constant 0 : i32
    return %c0_i32, %c0_i32_0 : i32, i32
  }
  func.func @transform_2(%arg0: i32) -> (i32, i32, i32) {
    %c0_i32 = arith.constant 0 : i32
    %c0_i32_0 = arith.constant 0 : i32
    %c0_i32_1 = arith.constant 0 : i32
    %c0_i32_2 = arith.constant 0 : i32
    return %c0_i32, %c0_i32_0, %c0_i32_1 : i32, i32, i32
  }
  func.func @transform_3(%arg0: i32) -> (i32, i32) {
    %c0_i32 = arith.constant 0 : i32
    %c0_i32_0 = arith.constant 0 : i32
    %c0_i32_1 = arith.constant 0 : i32
    return %c0_i32, %c0_i32_0 : i32, i32
  }
  func.func @transform_4(%arg0: i32) -> (i32, i32, i32) {
    %c0_i32 = arith.constant 0 : i32
    %c0_i32_0 = arith.constant 0 : i32
    %c0_i32_1 = arith.constant 0 : i32
    return %c0_i32, %arg0, %c0_i32_0 : i32, i32, i32
  }
}

</mosaic_0001>

<llo_original>
// kernel: tpu_custom_call.1
$region0: #{tpu_custom_call.1}
  #allocation0 [shape = 'u32[]', space=smem, size = 0x4, offset = 0x4, fixed_abs, tag = 'smem constant byte address 0x4 - core index']
  #allocation1 [shape = 'u32[144,128]{1,0:T(1,128)}', space=vmem, size = 0x12000, scoped, tag = 'internal scratch']
  %s0 = inlined_call_operand.hbm [shape: f32[4,16,128], index: 0, kind: input, shape index: {}]
  %s1 = inlined_call_operand.hbm [shape: bf16[576,128], index: 1, kind: input, shape index: {}]
  %s2 = inlined_call_operand.hbm [shape: bf16[2,128,512], index: 2, kind: input, shape index: {}]
  %s3 = inlined_call_operand.hbm [shape: f32[16,128], index: 3, kind: input, shape index: {}]
  %s4 = inlined_call_operand.hbm [shape: f32[3,16,128], index: 4, kind: output, shape index: {}]
  %s5 = sld [smem:[#allocation0]]
  $region42: #{tpu_custom_call.1} parent=0
    _
  %s7 = ssub.s32 1, %s5
  %s8 = scalar_select 0, %s7, %s5
  $region1: #{tpu_custom_call.1} parent=0
    #allocation2 [shape = 'u8[32768]{0}', space=vmem, size = 0x8000, scoped, tag = 'input window, operand 0, single buffered']
    #allocation3 [shape = 's32[1]{0}', space=sflag, size = 0x4, scoped, tag = 'scoped memory for tpu_custom_call.1']
    #allocation4 [shape = 's32[1]{0}', space=sflag, size = 0x4, scoped, tag = 'scoped memory for tpu_custom_call.1']
    #allocation5 [shape = 'u8[147456]{0}', space=vmem, size = 0x24000, scoped, tag = 'input window, operand 1, single buffered']
    #allocation6 [shape = 's32[1]{0}', space=sflag, size = 0x4, scoped, tag = 'scoped memory for tpu_custom_call.1']
    #allocation7 [shape = 'u8[262144]{0}', space=vmem, size = 0x40000, scoped, tag = 'input window, operand 2, single buffered']
    #allocation8 [shape = 'u8[8192]{0}', space=vmem, size = 0x2000, scoped, tag = 'input window, operand 3, single buffered']
    #allocation9 [shape = 's32[1]{0}', space=sflag, size = 0x4, scoped, tag = 'scoped memory for tpu_custom_call.1']
    #allocation10 [shape = 'u8[24576]{0}', space=vmem, size = 0x6000, scoped, tag = 'output window, operand 0, single buffered']
    %9 = vsyncpa [#allocation3], 0
    %10 = vsyncpa [#allocation6], 0
    %11 = vsyncpa [#allocation9], 0
    %12 = vsyncpa [#allocation4], 0
    // Predicated region
    $region2: #{tpu_custom_call.1} parent=1 // pred_check
      _
    $region3: #{tpu_custom_call.1} parent=1 // pred_check_branch
      %14 = sbr.rel (0) target = $region5
    $region4: #{tpu_custom_call.1} parent=1 // pred_region
      %s16 = ssub.s32 1024, 1024
      %17 = vsyncadd [#allocation3], %s16
      %s18 = sshll.u32 [#allocation2], 4
      %s19 = int_to_ptr.vmem [resolvable:$true] %s18
      %24 = dma.hbm_to_vmem [thread:$0]  %s0, 1024, %s19, [#allocation3], 128, 128, 8
    $region5: #{tpu_custom_call.1} parent=1 // pred_fallthru
      _
    // Predicated region
    $region6: #{tpu_custom_call.1} parent=1 // pred_check
      _
    $region7: #{tpu_custom_call.1} parent=1 // pred_check_branch
      %26 = sbr.rel (0) target = $region9
    $region8: #{tpu_custom_call.1} parent=1 // pred_region
      %s28 = ssub.s32 4608, 4608
      %29 = vsyncadd [#allocation6], %s28
      %s30 = sshll.u32 [#allocation5], 4
      %s31 = int_to_ptr.vmem [resolvable:$true] %s30
      %36 = dma.hbm_to_vmem [thread:$0]  %s1, 4608, %s31, [#allocation6], 64, 64, 4
    $region9: #{tpu_custom_call.1} parent=1 // pred_fallthru
      _
    // Predicated region
    $region10: #{tpu_custom_call.1} parent=1 // pred_check
      _
    $region11: #{tpu_custom_call.1} parent=1 // pred_check_branch
      %38 = sbr.rel (0) target = $region13
    $region12: #{tpu_custom_call.1} parent=1 // pred_region
      %s40 = ssub.s32 8192, 8192
      %41 = vsyncadd [#allocation6], %s40
      %s42 = sshll.u32 [#allocation7], 4
      %s43 = int_to_ptr.vmem [resolvable:$true] %s42
      %48 = dma.hbm_to_vmem [thread:$0]  %s2, 8192, %s43, [#allocation6], 256, 256, 16
    $region13: #{tpu_custom_call.1} parent=1 // pred_fallthru
      _
    // Predicated region
    $region14: #{tpu_custom_call.1} parent=1 // pred_check
      _
    $region15: #{tpu_custom_call.1} parent=1 // pred_check_branch
      %50 = sbr.rel (0) target = $region17
    $region16: #{tpu_custom_call.1} parent=1 // pred_region
      %s52 = ssub.s32 256, 256
      %53 = vsyncadd [#allocation9], %s52
      %s54 = sshll.u32 [#allocation8], 4
      %s55 = int_to_ptr.vmem [resolvable:$true] %s54
      %60 = dma.hbm_to_vmem [thread:$0]  %s3, 256, %s55, [#allocation9], 128, 128, 8
    $region17: #{tpu_custom_call.1} parent=1 // pred_fallthru
      _
    // Predicated region
    $region18: #{tpu_custom_call.1} parent=1 // pred_check
      _
    $region19: #{tpu_custom_call.1} parent=1 // pred_check_branch
      %62 = sbr.rel (0) target = $region21
    $region20: #{tpu_custom_call.1} parent=1 // pred_region
      %63 = dma.done [#allocation3], 1024
    $region21: #{tpu_custom_call.1} parent=1 // pred_fallthru
      _
    // Predicated region
    $region22: #{tpu_custom_call.1} parent=1 // pred_check
      _
    $region23: #{tpu_custom_call.1} parent=1 // pred_check_branch
      %65 = sbr.rel (0) target = $region25
    $region24: #{tpu_custom_call.1} parent=1 // pred_region
      %66 = dma.done [#allocation6], 4608
    $region25: #{tpu_custom_call.1} parent=1 // pred_fallthru
      _
    // Predicated region
    $region26: #{tpu_custom_call.1} parent=1 // pred_check
      _
    $region27: #{tpu_custom_call.1} parent=1 // pred_check_branch
      %68 = sbr.rel (0) target = $region29
    $region28: #{tpu_custom_call.1} parent=1 // pred_region
      %69 = dma.done [#allocation6], 8192
    $region29: #{tpu_custom_call.1} parent=1 // pred_fallthru
      _
    // Predicated region
    $region30: #{tpu_custom_call.1} parent=1 // pred_check
      _
    $region31: #{tpu_custom_call.1} parent=1 // pred_check_branch
      %71 = sbr.rel (0) target = $region33
    $region32: #{tpu_custom_call.1} parent=1 // pred_region
      %72 = dma.done [#allocation9], 256
    $region33: #{tpu_custom_call.1} parent=1 // pred_fallthru
      _
    %v74 = vld [vmem:[#allocation2] sm:$0xff]
    %v75 = vld [vmem:[#allocation2 + $0x8] sm:$0xff]
    %v76 = vpack.c.bf16 %v75, %v74
    %s77 = scalar_lea.vmem [#allocation2], 16
    %v78 = vld [vmem:[%s77] sm:$0xff]
    %v79 = vld [vmem:[%s77 + $0x8] sm:$0xff]
    %v80 = vpack.c.bf16 %v79, %v78
    %s81 = scalar_lea.vmem [#allocation2], 32
    %v82 = vld [vmem:[%s81] sm:$0xff]
    %v83 = vld [vmem:[%s81 + $0x8] sm:$0xff]
    %v84 = vpack.c.bf16 %v83, %v82
    %s85 = scalar_lea.vmem [#allocation2], 48
    %v86 = vld [vmem:[%s85] sm:$0xff]
    %v87 = vld [vmem:[%s85 + $0x8] sm:$0xff]
    %v88 = vld [vmem:[#allocation8] sm:$0x1]
    %v89 = vld [vmem:[#allocation8 + $0x1] sm:$0x1]
    %v90 = vld [vmem:[#allocation8 + $0x2] sm:$0x1]
    %v91 = vld [vmem:[#allocation8 + $0x3] sm:$0x1]
    %v92 = vld [vmem:[#allocation8 + $0x4] sm:$0x1]
    %v93 = vld [vmem:[#allocation8 + $0x5] sm:$0x1]
    %v94 = vld [vmem:[#allocation8 + $0x6] sm:$0x1]
    %v95 = vld [vmem:[#allocation8 + $0x7] sm:$0x1]
    %v96 = vld [vmem:[#allocation8 + $0x8] sm:$0x1]
    %v97 = vld [vmem:[#allocation5] sm:$0xf]
    %v98 = vld [vmem:[#allocation5 + $0x4] sm:$0xf]
    %v99 = vld [vmem:[#allocation5 + $0x8] sm:$0xf]
    %v100 = vld [vmem:[#allocation5 + $0xc] sm:$0xf]
    %v101 = vld [vmem:[#allocation5 + $0x10] sm:$0xf]
    %v102 = vld [vmem:[#allocation5 + $0x14] sm:$0xf]
    %v103 = vld [vmem:[#allocation5 + $0x18] sm:$0xf]
    %v104 = vld [vmem:[#allocation5 + $0x1c] sm:$0xf]
    %v105 = vld [vmem:[#allocation5 + $0x20] sm:$0xf]
    %v106 = vld [vmem:[#allocation5 + $0x24] sm:$0xf]
    %v107 = vld [vmem:[#allocation5 + $0x28] sm:$0xf]
    %v108 = vld [vmem:[#allocation5 + $0x2c] sm:$0xf]
    %v109 = vld [vmem:[#allocation5 + $0x30] sm:$0xf]
    %v110 = vld [vmem:[#allocation5 + $0x34] sm:$0xf]
    %v111 = vld [vmem:[#allocation5 + $0x38] sm:$0xf]
    %v112 = vld [vmem:[#allocation5 + $0x3c] sm:$0xf]
    %v113 = vlaneseq
    %v114 = vshrl.u32 %v113, 7
    %v115 = vsub.s32 0, %v114
    %v116 = vrot.slane %v88, %v115
    %v133 = vunpack.c.l.b16 %v97
    %v134 = vunpack.c.l.b16 %v98
    %v135 = vunpack.c.l.b16 %v99
    %v136 = vunpack.c.l.b16 %v100
    %v137 = vunpack.c.l.b16 %v101
    %v138 = vunpack.c.l.b16 %v102
    %v139 = vunpack.c.l.b16 %v103
    %v140 = vunpack.c.l.b16 %v104
    %v141 = vunpack.c.l.b16 %v105
    %v142 = vunpack.c.l.b16 %v106
    %v143 = vunpack.c.l.b16 %v107
    %v144 = vunpack.c.l.b16 %v108
    %v145 = vunpack.c.l.b16 %v109
    %v146 = vunpack.c.l.b16 %v110
    %v147 = vunpack.c.l.b16 %v111
    %v148 = vunpack.c.l.b16 %v112
    %v149 = vpack.c.b16 %v134, %v133
    %v150 = vpack.c.b16 %v136, %v135
    %v151 = vpack.c.b16 %v138, %v137
    %v152 = vpack.c.b16 %v140, %v139
    %v153 = vpack.c.b16 %v142, %v141
    %v154 = vpack.c.b16 %v144, %v143
    %v155 = vpack.c.b16 %v146, %v145
    %v156 = vpack.c.b16 %v148, %v147
    %165 = vmatprep.subr.bf16.mxu0 0
    %166 = vmatpush1.bf16.msra.mxu0 %v156
    %167 = vmatprep.subr.bf16.mxu0 0
    %168 = vmatpush1.bf16.msra.mxu0 %v155
    %169 = vmatprep.subr.bf16.mxu0 0
    %170 = vmatpush1.bf16.msra.mxu0 %v154
    %171 = vmatprep.subr.bf16.mxu0 0
    %172 = vmatpush1.bf16.msra.mxu0 %v153
    %173 = vmatprep.subr.bf16.mxu0 0
    %174 = vmatpush1.bf16.msra.mxu0 %v152
    %175 = vmatprep.subr.bf16.mxu0 0
    %176 = vmatpush1.bf16.msra.mxu0 %v151
    %177 = vmatprep.subr.bf16.mxu0 0
    %178 = vmatpush1.bf16.msra.mxu0 %v150
    %179 = vmatprep.subr.bf16.mxu0 0
    %180 = vmatpush1.bf16.msra.mxu0 %v149
    %181 = vmatprep.subr.bf16.mxu0 0
    %182 = vmatpush2.bf16.msra.mxu0 0
    %183 = vmatprep.subr.bf16.mxu0 0
    %184 = vmatpush2.bf16.msra.mxu0 0
    %185 = vmatprep.subr.bf16.mxu0 0
    %186 = vmatpush2.bf16.msra.mxu0 0
    %187 = vmatprep.subr.bf16.mxu0 0
    %188 = vmatpush2.bf16.msra.mxu0 0
    %189 = vmatprep.subr.bf16.mxu0 0
    %190 = vmatpush2.bf16.msra.mxu0 0
    %191 = vmatprep.subr.bf16.mxu0 0
    %192 = vmatpush2.bf16.msra.mxu0 0
    %193 = vmatprep.subr.bf16.mxu0 0
    %194 = vmatpush2.bf16.msra.mxu0 0
    %195 = vmatprep.subr.bf16.mxu0 0
    %196 = vmatpush2.bf16.msra.mxu0 0
    %197 = vmatprep.mubr.bf16.mxu0 0
    %198 = vmatmul.mubr.bf16.gmra.mxu0 %v80
    %v199 = vpop.f32.mrf.mxu0
    %v200 = vadd.f32 %v116, %v199
    %v201 = vpop.f32.mrf.mxu0
    %v202 = vpop.f32.mrf.mxu0
    %v203 = vadd.f32 %v116, %v202
    %v204 = vpop.f32.mrf.mxu0
    %205 = vdwg.mxu0
    %v208 = vcombine.high %v200, %v200
    %v210 = vunpack.c.l.s4 1966171168
    %v211 = vunpack.c.0.s8 %v210
    %v212 = vlaneseq
    %v213 = vshrl.u32 %v212, 7
    %v214 = vsub.s32 %v211, %v213
    %v215 = vrot.slane %v200, %v214
    %v217 = vunpack.c.l.s4 1966171168
    %v218 = vunpack.c.0.s8 %v217
    %v219 = vlaneseq
    %v220 = vshrl.u32 %v219, 7
    %v221 = vsub.s32 %v218, %v220
    %v222 = vrot.slane %v208, %v221
    %v223 = vcombine.high %v215, %v215
    %v224 = vcombine.high %v222, %v222
    %v226 = vunpack.c.l.s4 1966171168
    %v227 = vunpack.c.0.s8 %v226
    %v228 = vlaneseq
    %v229 = vshrl.u32 %v228, 7
    %v230 = vsub.s32 %v227, %v229
    %v231 = vrot.slane %v215, %v230
    %v233 = vunpack.c.l.s4 1966171168
    %v234 = vunpack.c.0.s8 %v233
    %v235 = vlaneseq
    %v236 = vshrl.u32 %v235, 7
    %v237 = vsub.s32 %v234, %v236
    %v238 = vrot.slane %v222, %v237
    %v240 = vunpack.c.l.s4 1966171168
    %v241 = vunpack.c.0.s8 %v240
    %v242 = vlaneseq
    %v243 = vshrl.u32 %v242, 7
    %v244 = vsub.s32 %v241, %v243
    %v245 = vrot.slane %v223, %v244
    %v247 = vunpack.c.l.s4 1966171168
    %v248 = vunpack.c.0.s8 %v247
    %v249 = vlaneseq
    %v250 = vshrl.u32 %v249, 7
    %v251 = vsub.s32 %v248, %v250
    %v252 = vrot.slane %v224, %v251
    %v253 = vcombine.high %v231, %v231
    %v254 = vcombine.high %v238, %v238
    %v255 = vcombine.high %v245, %v245
    %v256 = vcombine.high %v252, %v252
    %v257 = vcombine.high %v203, %v203
    %v259 = vunpack.c.l.s4 1966171168
    %v260 = vunpack.c.0.s8 %v259
    %v261 = vlaneseq
    %v262 = vshrl.u32 %v261, 7
    %v263 = vsub.s32 %v260, %v262
    %v264 = vrot.slane %v203, %v263
    %v266 = vunpack.c.l.s4 1966171168
    %v267 = vunpack.c.0.s8 %v266
    %v268 = vlaneseq
    %v269 = vshrl.u32 %v268, 7
    %v270 = vsub.s32 %v267, %v269
    %v271 = vrot.slane %v257, %v270
    %v272 = vcombine.high %v264, %v264
    %v273 = vcombine.high %v271, %v271
    %v275 = vunpack.c.l.s4 1966171168
    %v276 = vunpack.c.0.s8 %v275
    %v277 = vlaneseq
    %v278 = vshrl.u32 %v277, 7
    %v279 = vsub.s32 %v276, %v278
    %v280 = vrot.slane %v264, %v279
    %v282 = vunpack.c.l.s4 1966171168
    %v283 = vunpack.c.0.s8 %v282
    %v284 = vlaneseq
    %v285 = vshrl.u32 %v284, 7
    %v286 = vsub.s32 %v283, %v285
    %v287 = vrot.slane %v271, %v286
    %v289 = vunpack.c.l.s4 1966171168
    %v290 = vunpack.c.0.s8 %v289
    %v291 = vlaneseq
    %v292 = vshrl.u32 %v291, 7
    %v293 = vsub.s32 %v290, %v292
    %v294 = vrot.slane %v272, %v293
    %v296 = vunpack.c.l.s4 1966171168
    %v297 = vunpack.c.0.s8 %v296
    %v298 = vlaneseq
    %v299 = vshrl.u32 %v298, 7
    %v300 = vsub.s32 %v297, %v299
    %v301 = vrot.slane %v273, %v300
    %v302 = vcombine.high %v280, %v280
    %v303 = vcombine.high %v287, %v287
    %v304 = vcombine.high %v294, %v294
    %v305 = vcombine.high %v301, %v301
    %v306 = vlaneseq
    %v307 = vshrl.u32 %v306, 7
    %v308 = vsub.s32 0, %v307
    %v309 = vrot.slane %v231, %v308
    %v310 = vlaneseq
    %v311 = vshrl.u32 %v310, 7
    %v312 = vsub.s32 0, %v311
    %v313 = vrot.slane %v245, %v312
    %v314 = vlaneseq
    %v315 = vshrl.u32 %v314, 7
    %v316 = vsub.s32 0, %v315
    %v317 = vrot.slane %v253, %v316
    %v318 = vlaneseq
    %v319 = vshrl.u32 %v318, 7
    %v320 = vsub.s32 0, %v319
    %v321 = vrot.slane %v255, %v320
    %v322 = vlaneseq
    %v323 = vshrl.u32 %v322, 7
    %v324 = vsub.s32 0, %v323
    %v325 = vrot.slane %v238, %v324
    %v326 = vlaneseq
    %v327 = vshrl.u32 %v326, 7
    %v328 = vsub.s32 0, %v327
    %v329 = vrot.slane %v252, %v328
    %v330 = vlaneseq
    %v331 = vshrl.u32 %v330, 7
    %v332 = vsub.s32 0, %v331
    %v333 = vrot.slane %v254, %v332
    %v334 = vlaneseq
    %v335 = vshrl.u32 %v334, 7
    %v336 = vsub.s32 0, %v335
    %v337 = vrot.slane %v256, %v336
    %v338 = vlaneseq
    %v339 = vshrl.u32 %v338, 7
    %v340 = vsub.s32 0, %v339
    %v341 = vrot.slane %v280, %v340
    %v342 = vlaneseq
    %v343 = vshrl.u32 %v342, 7
    %v344 = vsub.s32 0, %v343
    %v345 = vrot.slane %v294, %v344
    %v346 = vlaneseq
    %v347 = vshrl.u32 %v346, 7
    %v348 = vsub.s32 0, %v347
    %v349 = vrot.slane %v302, %v348
    %v350 = vlaneseq
    %v351 = vshrl.u32 %v350, 7
    %v352 = vsub.s32 0, %v351
    %v353 = vrot.slane %v304, %v352
    %v354 = vlaneseq
    %v355 = vshrl.u32 %v354, 7
    %v356 = vsub.s32 0, %v355
    %v357 = vrot.slane %v287, %v356
    %v358 = vlaneseq
    %v359 = vshrl.u32 %v358, 7
    %v360 = vsub.s32 0, %v359
    %v361 = vrot.slane %v301, %v360
    %v362 = vlaneseq
    %v363 = vshrl.u32 %v362, 7
    %v364 = vsub.s32 0, %v363
    %v365 = vrot.slane %v303, %v364
    %v366 = vlaneseq
    %v367 = vshrl.u32 %v366, 7
    %v368 = vsub.s32 0, %v367
    %v369 = vrot.slane %v305, %v368
    %370 = vrot.lane.b32.xlu0 %v309, 96
    %v371 = vpop.permute.xlu0 %370
    %372 = vrot.lane.b32.xlu0 %v313, 96
    %v373 = vpop.permute.xlu0 %372
    %374 = vrot.lane.b32.xlu0 %v317, 96
    %v375 = vpop.permute.xlu0 %374
    %376 = vrot.lane.b32.xlu0 %v321, 96
    %v377 = vpop.permute.xlu0 %376
    %378 = vrot.lane.b32.xlu0 %v325, 96
    %v379 = vpop.permute.xlu0 %378
    %380 = vrot.lane.b32.xlu0 %v329, 96
    %v381 = vpop.permute.xlu0 %380
    %382 = vrot.lane.b32.xlu0 %v333, 96
    %v383 = vpop.permute.xlu0 %382
    %384 = vrot.lane.b32.xlu0 %v337, 96
    %v385 = vpop.permute.xlu0 %384
    %386 = vrot.lane.b32.xlu0 %v341, 96
    %v387 = vpop.permute.xlu0 %386
    %388 = vrot.lane.b32.xlu0 %v345, 96
    %v389 = vpop.permute.xlu0 %388
    %390 = vrot.lane.b32.xlu0 %v349, 96
    %v391 = vpop.permute.xlu0 %390
    %392 = vrot.lane.b32.xlu0 %v353, 96
    %v393 = vpop.permute.xlu0 %392
    %394 = vrot.lane.b32.xlu0 %v357, 96
    %v395 = vpop.permute.xlu0 %394
    %396 = vrot.lane.b32.xlu0 %v361, 96
    %v397 = vpop.permute.xlu0 %396
    %398 = vrot.lane.b32.xlu0 %v365, 96
    %v399 = vpop.permute.xlu0 %398
    %400 = vrot.lane.b32.xlu0 %v369, 96
    %v401 = vpop.permute.xlu0 %400
    %v418 = vadd.f32 %v200, %v371
    %v419 = vadd.f32 %v200, %v373
    %v420 = vadd.f32 %v200, %v375
    %v421 = vadd.f32 %v200, %v377
    %v422 = vadd.f32 %v200, %v379
    %v423 = vadd.f32 %v200, %v381
    %v424 = vadd.f32 %v200, %v383
    %v425 = vadd.f32 %v200, %v385
    %v426 = vadd.f32 %v203, %v387
    %v427 = vadd.f32 %v203, %v389
    %v428 = vadd.f32 %v203, %v391
    %v429 = vadd.f32 %v203, %v393
    %v430 = vadd.f32 %v203, %v395
    %v431 = vadd.f32 %v203, %v397
    %v432 = vadd.f32 %v203, %v399
    %v433 = vadd.f32 %v203, %v401
    %v434 = vmax.f32 %v418, 0.0
    %v435 = vmax.f32 %v419, 0.0
    %v436 = vmax.f32 %v420, 0.0
    %v437 = vmax.f32 %v421, 0.0
    %v438 = vmax.f32 %v422, 0.0
    %v439 = vmax.f32 %v423, 0.0
    %v440 = vmax.f32 %v424, 0.0
    %v441 = vmax.f32 %v425, 0.0
    %v442 = vmax.f32 %v426, 0.0
    %v443 = vmax.f32 %v427, 0.0
    %v444 = vmax.f32 %v428, 0.0
    %v445 = vmax.f32 %v429, 0.0
    %v446 = vmax.f32 %v430, 0.0
    %v447 = vmax.f32 %v431, 0.0
    %v448 = vmax.f32 %v432, 0.0
    %v449 = vmax.f32 %v433, 0.0
    %v450 = vpack.c.bf16 %v435, %v434
    %v451 = vpack.c.bf16 %v437, %v436
    %v452 = vpack.c.bf16 %v439, %v438
    %v453 = vpack.c.bf16 %v441, %v440
    %v454 = vpack.c.bf16 %v443, %v442
    %v455 = vpack.c.bf16 %v445, %v444
    %v456 = vpack.c.bf16 %v447, %v446
    %v457 = vpack.c.bf16 %v449, %v448
    %v458 = vld [vmem:[#allocation5 + $0x40] sm:$0xf]
    %v459 = vld [vmem:[#allocation5 + $0x44] sm:$0xf]
    %v460 = vld [vmem:[#allocation5 + $0x48] sm:$0xf]
    %v461 = vld [vmem:[#allocation5 + $0x4c] sm:$0xf]
    %v462 = vlaneseq
    %v463 = vshrl.u32 %v462, 7
    %v464 = vsub.s32 0, %v463
    %v465 = vrot.slane %v89, %v464
    %v470 = vunpack.c.l.b16 %v458
    %v471 = vunpack.c.l.b16 %v459
    %v472 = vunpack.c.l.b16 %v460
    %v473 = vunpack.c.l.b16 %v461
    %v474 = vpack.c.b16 %v471, %v470
    %v475 = vpack.c.b16 %v473, %v472
    %vm478 = vcmask 261120
    %v480 = vsel %vm478, %v450, 0
    %v483 = vsel %vm478, %v451, 0
    %v486 = vsel %vm478, %v452, 0
    %v489 = vsel %vm478, %v453, 0
    %v492 = vsel %vm478, %v454, 0
    %v495 = vsel %vm478, %v455, 0
    %v498 = vsel %vm478, %v456, 0
    %v501 = vsel %vm478, %v457, 0
    %503 = vmatprep.subr.bf16.mxu0 0
    %504 = vmatpush1.bf16.msra.mxu0 0
    %505 = vmatprep.subr.bf16.mxu0 0
    %506 = vmatpush1.bf16.msra.mxu0 0
    %507 = vmatprep.subr.bf16.mxu0 0
    %508 = vmatpush1.bf16.msra.mxu0 0
    %509 = vmatprep.subr.bf16.mxu0 0
    %510 = vmatpush1.bf16.msra.mxu0 0
    %511 = vmatprep.subr.bf16.mxu0 0
    %512 = vmatpush1.bf16.msra.mxu0 0
    %513 = vmatprep.subr.bf16.mxu0 0
    %514 = vmatpush1.bf16.msra.mxu0 0
    %515 = vmatprep.subr.bf16.mxu0 0
    %516 = vmatpush1.bf16.msra.mxu0 %v475
    %517 = vmatprep.subr.bf16.mxu0 0
    %518 = vmatpush1.bf16.msra.mxu0 %v474
    %519 = vmatprep.subr.bf16.mxu0 0
    %520 = vmatpush2.bf16.msra.mxu0 0
    %521 = vmatprep.subr.bf16.mxu0 0
    %522 = vmatpush2.bf16.msra.mxu0 0
    %523 = vmatprep.subr.bf16.mxu0 0
    %524 = vmatpush2.bf16.msra.mxu0 0
    %525 = vmatprep.subr.bf16.mxu0 0
    %526 = vmatpush2.bf16.msra.mxu0 0
    %527 = vmatprep.subr.bf16.mxu0 0
    %528 = vmatpush2.bf16.msra.mxu0 0
    %529 = vmatprep.subr.bf16.mxu0 0
    %530 = vmatpush2.bf16.msra.mxu0 0
    %531 = vmatprep.subr.bf16.mxu0 0
    %532 = vmatpush2.bf16.msra.mxu0 0
    %533 = vmatprep.subr.bf16.mxu0 0
    %534 = vmatpush2.bf16.msra.mxu0 0
    %535 = vmatprep.mubr.bf16.mxu0 0
    %536 = vmatmul.mubr.bf16.gmra.mxu0 %v480
    %v537 = vpop.f32.mrf.mxu0
    %v538 = vadd.f32 %v465, %v537
    %v539 = vpop.f32.mrf.mxu0
    %v540 = vpop.f32.mrf.mxu0
    %v541 = vadd.f32 %v465, %v540
    %v542 = vpop.f32.mrf.mxu0
    %543 = vmatprep.mubr.bf16.mxu0 0
    %544 = vmatmul.mubr.bf16.gmra.mxu0 %v483
    %v545 = vpop.f32.mrf.mxu0
    %v546 = vadd.f32 %v465, %v545
    %v547 = vpop.f32.mrf.mxu0
    %v548 = vpop.f32.mrf.mxu0
    %v549 = vadd.f32 %v465, %v548
    %v550 = vpop.f32.mrf.mxu0
    %551 = vmatprep.mubr.bf16.mxu0 0
    %552 = vmatmul.mubr.bf16.gmra.mxu0 %v486
    %v553 = vpop.f32.mrf.mxu0
    %v554 = vadd.f32 %v465, %v553
    %v555 = vpop.f32.mrf.mxu0
    %v556 = vpop.f32.mrf.mxu0
    %v557 = vadd.f32 %v465, %v556
    %v558 = vpop.f32.mrf.mxu0
    %559 = vmatprep.mubr.bf16.mxu0 0
    %560 = vmatmul.mubr.bf16.gmra.mxu0 %v489
    %v561 = vpop.f32.mrf.mxu0
    %v562 = vadd.f32 %v465, %v561
    %v563 = vpop.f32.mrf.mxu0
    %v564 = vpop.f32.mrf.mxu0
    %v565 = vadd.f32 %v465, %v564
    %v566 = vpop.f32.mrf.mxu0
    %567 = vmatprep.mubr.bf16.mxu0 0
    %568 = vmatmul.mubr.bf16.gmra.mxu0 %v492
    %v569 = vpop.f32.mrf.mxu0
    %v570 = vadd.f32 %v465, %v569
    %v571 = vpop.f32.mrf.mxu0
    %v572 = vpop.f32.mrf.mxu0
    %v573 = vadd.f32 %v465, %v572
    %v574 = vpop.f32.mrf.mxu0
    %575 = vmatprep.mubr.bf16.mxu0 0
    %576 = vmatmul.mubr.bf16.gmra.mxu0 %v495
    %v577 = vpop.f32.mrf.mxu0
    %v578 = vadd.f32 %v465, %v577
    %v579 = vpop.f32.mrf.mxu0
    %v580 = vpop.f32.mrf.mxu0
    %v581 = vadd.f32 %v465, %v580
    %v582 = vpop.f32.mrf.mxu0
    %583 = vmatprep.mubr.bf16.mxu0 0
    %584 = vmatmul.mubr.bf16.gmra.mxu0 %v498
    %v585 = vpop.f32.mrf.mxu0
    %v586 = vadd.f32 %v465, %v585
    %v587 = vpop.f32.mrf.mxu0
    %v588 = vpop.f32.mrf.mxu0
    %v589 = vadd.f32 %v465, %v588
    %v590 = vpop.f32.mrf.mxu0
    %591 = vmatprep.mubr.bf16.mxu0 0
    %592 = vmatmul.mubr.bf16.gmra.mxu0 %v501
    %v593 = vpop.f32.mrf.mxu0
    %v594 = vadd.f32 %v465, %v593
    %v595 = vpop.f32.mrf.mxu0
    %v596 = vpop.f32.mrf.mxu0
    %v597 = vadd.f32 %v465, %v596
    %v598 = vpop.f32.mrf.mxu0
    %599 = vdwg.mxu0
    %v600 = vmax.f32 %v538, 0.0
    %v601 = vmax.f32 %v541, 0.0
    %v602 = vmax.f32 %v546, 0.0
    %v603 = vmax.f32 %v549, 0.0
    %v604 = vmax.f32 %v554, 0.0
    %v605 = vmax.f32 %v557, 0.0
    %v606 = vmax.f32 %v562, 0.0
    %v607 = vmax.f32 %v565, 0.0
    %v608 = vmax.f32 %v570, 0.0
    %v609 = vmax.f32 %v573, 0.0
    %v610 = vmax.f32 %v578, 0.0
    %v611 = vmax.f32 %v581, 0.0
    %v612 = vmax.f32 %v586, 0.0
    %v613 = vmax.f32 %v589, 0.0
    %v614 = vmax.f32 %v594, 0.0
    %v615 = vmax.f32 %v597, 0.0
    %v616 = vrot.slane %v600, 4
    %v617 = vadd.f32 %v600, %v616
    %v618 = vrot.slane %v617, 2
    %v619 = vadd.f32 %v617, %v618
    %v620 = vrot.slane %v619, 1
    %v621 = vadd.f32 %v619, %v620
    %v622 = vrot.slane %v601, 4
    %v623 = vadd.f32 %v601, %v622
    %v624 = vrot.slane %v623, 2
    %v625 = vadd.f32 %v623, %v624
    %v626 = vrot.slane %v625, 1
    %v627 = vadd.f32 %v625, %v626
    %v628 = vrot.slane %v602, 4
    %v629 = vadd.f32 %v602, %v628
    %v630 = vrot.slane %v629, 2
    %v631 = vadd.f32 %v629, %v630
    %v632 = vrot.slane %v631, 1
    %v633 = vadd.f32 %v631, %v632
    %v634 = vrot.slane %v603, 4
    %v635 = vadd.f32 %v603, %v634
    %v636 = vrot.slane %v635, 2
    %v637 = vadd.f32 %v635, %v636
    %v638 = vrot.slane %v637, 1
    %v639 = vadd.f32 %v637, %v638
    %v640 = vrot.slane %v604, 4
    %v641 = vadd.f32 %v604, %v640
    %v642 = vrot.slane %v641, 2
    %v643 = vadd.f32 %v641, %v642
    %v644 = vrot.slane %v643, 1
    %v645 = vadd.f32 %v643, %v644
    %v646 = vrot.slane %v605, 4
    %v647 = vadd.f32 %v605, %v646
    %v648 = vrot.slane %v647, 2
    %v649 = vadd.f32 %v647, %v648
    %v650 = vrot.slane %v649, 1
    %v651 = vadd.f32 %v649, %v650
    %v652 = vrot.slane %v606, 4
    %v653 = vadd.f32 %v606, %v652
    %v654 = vrot.slane %v653, 2
    %v655 = vadd.f32 %v653, %v654
    %v656 = vrot.slane %v655, 1
    %v657 = vadd.f32 %v655, %v656
    %v658 = vrot.slane %v607, 4
    %v659 = vadd.f32 %v607, %v658
    %v660 = vrot.slane %v659, 2
    %v661 = vadd.f32 %v659, %v660
    %v662 = vrot.slane %v661, 1
    %v663 = vadd.f32 %v661, %v662
    %v664 = vrot.slane %v608, 4
    %v665 = vadd.f32 %v608, %v664
    %v666 = vrot.slane %v665, 2
    %v667 = vadd.f32 %v665, %v666
    %v668 = vrot.slane %v667, 1
    %v669 = vadd.f32 %v667, %v668
    %v670 = vrot.slane %v609, 4
    %v671 = vadd.f32 %v609, %v670
    %v672 = vrot.slane %v671, 2
    %v673 = vadd.f32 %v671, %v672
    %v674 = vrot.slane %v673, 1
    %v675 = vadd.f32 %v673, %v674
    %v676 = vrot.slane %v610, 4
    %v677 = vadd.f32 %v610, %v676
    %v678 = vrot.slane %v677, 2
    %v679 = vadd.f32 %v677, %v678
    %v680 = vrot.slane %v679, 1
    %v681 = vadd.f32 %v679, %v680
    %v682 = vrot.slane %v611, 4
    %v683 = vadd.f32 %v611, %v682
    %v684 = vrot.slane %v683, 2
    %v685 = vadd.f32 %v683, %v684
    %v686 = vrot.slane %v685, 1
    %v687 = vadd.f32 %v685, %v686
    %v688 = vrot.slane %v612, 4
    %v689 = vadd.f32 %v612, %v688
    %v690 = vrot.slane %v689, 2
    %v691 = vadd.f32 %v689, %v690
    %v692 = vrot.slane %v691, 1
    %v693 = vadd.f32 %v691, %v692
    %v694 = vrot.slane %v613, 4
    %v695 = vadd.f32 %v613, %v694
    %v696 = vrot.slane %v695, 2
    %v697 = vadd.f32 %v695, %v696
    %v698 = vrot.slane %v697, 1
    %v699 = vadd.f32 %v697, %v698
    %v700 = vrot.slane %v614, 4
    %v701 = vadd.f32 %v614, %v700
    %v702 = vrot.slane %v701, 2
    %v703 = vadd.f32 %v701, %v702
    %v704 = vrot.slane %v703, 1
    %v705 = vadd.f32 %v703, %v704
    %v706 = vrot.slane %v615, 4
    %v707 = vadd.f32 %v615, %v706
    %v708 = vrot.slane %v707, 2
    %v709 = vadd.f32 %v707, %v708
    %v710 = vrot.slane %v709, 1
    %v711 = vadd.f32 %v709, %v710
    %v712 = vld [vmem:[#allocation5 + $0x50] sm:$0xf]
    %v713 = vld [vmem:[#allocation5 + $0x54] sm:$0xf]
    %v714 = vld [vmem:[#allocation5 + $0x58] sm:$0xf]
    %v715 = vld [vmem:[#allocation5 + $0x5c] sm:$0xf]
    %v716 = vld [vmem:[#allocation5 + $0x60] sm:$0xf]
    %v717 = vld [vmem:[#allocation5 + $0x64] sm:$0xf]
    %v718 = vld [vmem:[#allocation5 + $0x68] sm:$0xf]
    %v719 = vld [vmem:[#allocation5 + $0x6c] sm:$0xf]
    %v720 = vld [vmem:[#allocation5 + $0x70] sm:$0xf]
    %v721 = vld [vmem:[#allocation5 + $0x74] sm:$0xf]
    %v722 = vld [vmem:[#allocation5 + $0x78] sm:$0xf]
    %v723 = vld [vmem:[#allocation5 + $0x7c] sm:$0xf]
    %v724 = vld [vmem:[#allocation5 + $0x80] sm:$0xf]
    %v725 = vld [vmem:[#allocation5 + $0x84] sm:$0xf]
    %v726 = vld [vmem:[#allocation5 + $0x88] sm:$0xf]
    %v727 = vld [vmem:[#allocation5 + $0x8c] sm:$0xf]
    %v728 = vpack.c.bf16 %v621, %v621
    %v729 = vpack.c.bf16 %v627, %v627
    %v730 = vpack.c.bf16 %v633, %v633
    %v731 = vpack.c.bf16 %v639, %v639
    %v732 = vpack.c.bf16 %v645, %v645
    %v733 = vpack.c.bf16 %v651, %v651
    %v734 = vpack.c.bf16 %v657, %v657
    %v735 = vpack.c.bf16 %v663, %v663
    %v736 = vpack.c.bf16 %v669, %v669
    %v737 = vpack.c.bf16 %v675, %v675
    %v738 = vpack.c.bf16 %v681, %v681
    %v739 = vpack.c.bf16 %v687, %v687
    %v740 = vpack.c.bf16 %v693, %v693
    %v741 = vpack.c.bf16 %v699, %v699
    %v742 = vpack.c.bf16 %v705, %v705
    %v743 = vpack.c.bf16 %v711, %v711
    %v744 = vld [vmem:[#allocation5 + $0x90] sm:$0xf]
    %v745 = vld [vmem:[#allocation5 + $0x94] sm:$0xf]
    %v746 = vld [vmem:[#allocation5 + $0x98] sm:$0xf]
    %v747 = vld [vmem:[#allocation5 + $0x9c] sm:$0xf]
    %v748 = vld [vmem:[#allocation5 + $0xa0] sm:$0xf]
    %v749 = vld [vmem:[#allocation5 + $0xa4] sm:$0xf]
    %v750 = vld [vmem:[#allocation5 + $0xa8] sm:$0xf]
    %v751 = vld [vmem:[#allocation5 + $0xac] sm:$0xf]
    %v752 = vld [vmem:[#allocation5 + $0xb0] sm:$0xf]
    %v753 = vld [vmem:[#allocation5 + $0xb4] sm:$0xf]
    %v754 = vld [vmem:[#allocation5 + $0xb8] sm:$0xf]
    %v755 = vld [vmem:[#allocation5 + $0xbc] sm:$0xf]
    %v756 = vld [vmem:[#allocation5 + $0xc0] sm:$0xf]
    %v757 = vld [vmem:[#allocation5 + $0xc4] sm:$0xf]
    %v758 = vld [vmem:[#allocation5 + $0xc8] sm:$0xf]
    %v759 = vld [vmem:[#allocation5 + $0xcc] sm:$0xf]
    %v776 = vunpack.c.l.b16 %v728
    %v777 = vunpack.c.l.b16 %v729
    %v778 = vunpack.c.l.b16 %v730
    %v779 = vunpack.c.l.b16 %v731
    %v780 = vunpack.c.l.b16 %v732
    %v781 = vunpack.c.l.b16 %v733
    %v782 = vunpack.c.l.b16 %v734
    %v783 = vunpack.c.l.b16 %v735
    %v784 = vunpack.c.l.b16 %v736
    %v785 = vunpack.c.l.b16 %v737
    %v786 = vunpack.c.l.b16 %v738
    %v787 = vunpack.c.l.b16 %v739
    %v788 = vunpack.c.l.b16 %v740
    %v789 = vunpack.c.l.b16 %v741
    %v790 = vunpack.c.l.b16 %v742
    %v791 = vunpack.c.l.b16 %v743
    %vm792 = vcmask 1041409
    %v793 = vsel %vm792, %v777, %v776
    %vm794 = vcmask 1042434
    %v795 = vsel %vm794, %v778, %v793
    %vm796 = vcmask 1043459
    %v797 = vsel %vm796, %v779, %v795
    %vm798 = vcmask 1044484
    %v799 = vsel %vm798, %v780, %v797
    %vm800 = vcmask 1045509
    %v801 = vsel %vm800, %v781, %v799
    %vm802 = vcmask 1046534
    %v803 = vsel %vm802, %v782, %v801
    %vm804 = vcmask 1047559
    %v805 = vsel %vm804, %v783, %v803
    %v806 = vsel %vm792, %v785, %v784
    %v807 = vsel %vm794, %v786, %v806
    %v808 = vsel %vm796, %v787, %v807
    %v809 = vsel %vm798, %v788, %v808
    %v810 = vsel %vm800, %v789, %v809
    %v811 = vsel %vm802, %v790, %v810
    %v812 = vsel %vm804, %v791, %v811
    %v813 = vpack.c.b16 %v812, %v805
    %v831 = vunpack.c.l.b16 %v744
    %v832 = vunpack.c.l.b16 %v745
    %v833 = vunpack.c.l.b16 %v746
    %v834 = vunpack.c.l.b16 %v747
    %v835 = vunpack.c.l.b16 %v748
    %v836 = vunpack.c.l.b16 %v749
    %v837 = vunpack.c.l.b16 %v750
    %v838 = vunpack.c.l.b16 %v751
    %v839 = vunpack.c.l.b16 %v752
    %v840 = vunpack.c.l.b16 %v753
    %v841 = vunpack.c.l.b16 %v754
    %v842 = vunpack.c.l.b16 %v755
    %v843 = vunpack.c.l.b16 %v756
    %v844 = vunpack.c.l.b16 %v757
    %v845 = vunpack.c.l.b16 %v758
    %v846 = vunpack.c.l.b16 %v759
    %v847 = vpack.c.b16 %v832, %v831
    %v848 = vpack.c.b16 %v834, %v833
    %v849 = vpack.c.b16 %v836, %v835
    %v850 = vpack.c.b16 %v838, %v837
    %v851 = vpack.c.b16 %v840, %v839
    %v852 = vpack.c.b16 %v842, %v841
    %v853 = vpack.c.b16 %v844, %v843
    %v854 = vpack.c.b16 %v846, %v845
    %863 = vmatprep.subr.bf16.mxu0 0
    %864 = vmatpush1.bf16.msra.mxu0 %v854
    %865 = vmatprep.subr.bf16.mxu0 0
    %866 = vmatpush1.bf16.msra.mxu0 %v853
    %867 = vmatprep.subr.bf16.mxu0 0
    %868 = vmatpush1.bf16.msra.mxu0 %v852
    %869 = vmatprep.subr.bf16.mxu0 0
    %870 = vmatpush1.bf16.msra.mxu0 %v851
    %871 = vmatprep.subr.bf16.mxu0 0
    %872 = vmatpush1.bf16.msra.mxu0 %v850
    %873 = vmatprep.subr.bf16.mxu0 0
    %874 = vmatpush1.bf16.msra.mxu0 %v849
    %875 = vmatprep.subr.bf16.mxu0 0
    %876 = vmatpush1.bf16.msra.mxu0 %v848
    %877 = vmatprep.subr.bf16.mxu0 0
    %878 = vmatpush1.bf16.msra.mxu0 %v847
    %879 = vmatprep.subr.bf16.mxu0 0
    %880 = vmatpush2.bf16.msra.mxu0 0
    %881 = vmatprep.subr.bf16.mxu0 0
    %882 = vmatpush2.bf16.msra.mxu0 0
    %883 = vmatprep.subr.bf16.mxu0 0
    %884 = vmatpush2.bf16.msra.mxu0 0
    %885 = vmatprep.subr.bf16.mxu0 0
    %886 = vmatpush2.bf16.msra.mxu0 0
    %887 = vmatprep.subr.bf16.mxu0 0
    %888 = vmatpush2.bf16.msra.mxu0 0
    %889 = vmatprep.subr.bf16.mxu0 0
    %890 = vmatpush2.bf16.msra.mxu0 0
    %891 = vmatprep.subr.bf16.mxu0 0
    %892 = vmatpush2.bf16.msra.mxu0 0
    %893 = vmatprep.subr.bf16.mxu0 0
    %894 = vmatpush2.bf16.msra.mxu0 0
    %895 = vmatprep.mubr.bf16.mxu0 0
    %896 = vmatmul.mubr.bf16.gmra.mxu0 %v813
    %v897 = vpop.f32.mrf.mxu0
    %v898 = vadd.f32 0.0, %v897
    %v899 = vpop.f32.mrf.mxu0
    %v900 = vpop.f32.mrf.mxu0
    %v901 = vadd.f32 0.0, %v900
    %v902 = vpop.f32.mrf.mxu0
    %903 = vdwg.mxu0
    %v920 = vunpack.c.l.b16 %v712
    %v921 = vunpack.c.l.b16 %v713
    %v922 = vunpack.c.l.b16 %v714
    %v923 = vunpack.c.l.b16 %v715
    %v924 = vunpack.c.l.b16 %v716
    %v925 = vunpack.c.l.b16 %v717
    %v926 = vunpack.c.l.b16 %v718
    %v927 = vunpack.c.l.b16 %v719
    %v928 = vunpack.c.l.b16 %v720
    %v929 = vunpack.c.l.b16 %v721
    %v930 = vunpack.c.l.b16 %v722
    %v931 = vunpack.c.l.b16 %v723
    %v932 = vunpack.c.l.b16 %v724
    %v933 = vunpack.c.l.b16 %v725
    %v934 = vunpack.c.l.b16 %v726
    %v935 = vunpack.c.l.b16 %v727
    %v936 = vpack.c.b16 %v921, %v920
    %v937 = vpack.c.b16 %v923, %v922
    %v938 = vpack.c.b16 %v925, %v924
    %v939 = vpack.c.b16 %v927, %v926
    %v940 = vpack.c.b16 %v929, %v928
    %v941 = vpack.c.b16 %v931, %v930
    %v942 = vpack.c.b16 %v933, %v932
    %v943 = vpack.c.b16 %v935, %v934
    %952 = vmatprep.subr.bf16.mxu0 0
    %953 = vmatpush1.bf16.msra.mxu0 %v943
    %954 = vmatprep.subr.bf16.mxu0 0
    %955 = vmatpush1.bf16.msra.mxu0 %v942
    %956 = vmatprep.subr.bf16.mxu0 0
    %957 = vmatpush1.bf16.msra.mxu0 %v941
    %958 = vmatprep.subr.bf16.mxu0 0
    %959 = vmatpush1.bf16.msra.mxu0 %v940
    %960 = vmatprep.subr.bf16.mxu0 0
    %961 = vmatpush1.bf16.msra.mxu0 %v939
    %962 = vmatprep.subr.bf16.mxu0 0
    %963 = vmatpush1.bf16.msra.mxu0 %v938
    %964 = vmatprep.subr.bf16.mxu0 0
    %965 = vmatpush1.bf16.msra.mxu0 %v937
    %966 = vmatprep.subr.bf16.mxu0 0
    %967 = vmatpush1.bf16.msra.mxu0 %v936
    %968 = vmatprep.subr.bf16.mxu0 0
    %969 = vmatpush2.bf16.msra.mxu0 0
    %970 = vmatprep.subr.bf16.mxu0 0
    %971 = vmatpush2.bf16.msra.mxu0 0
    %972 = vmatprep.subr.bf16.mxu0 0
    %973 = vmatpush2.bf16.msra.mxu0 0
    %974 = vmatprep.subr.bf16.mxu0 0
    %975 = vmatpush2.bf16.msra.mxu0 0
    %976 = vmatprep.subr.bf16.mxu0 0
    %977 = vmatpush2.bf16.msra.mxu0 0
    %978 = vmatprep.subr.bf16.mxu0 0
    %979 = vmatpush2.bf16.msra.mxu0 0
    %980 = vmatprep.subr.bf16.mxu0 0
    %981 = vmatpush2.bf16.msra.mxu0 0
    %982 = vmatprep.subr.bf16.mxu0 0
    %983 = vmatpush2.bf16.msra.mxu0 0
    %984 = vmatprep.mubr.bf16.mxu0 0
    %985 = vmatmul.mubr.bf16.gmra.mxu0 %v76
    %v986 = vpop.f32.mrf.mxu0
    %v987 = vadd.f32 %v898, %v986
    %v988 = vpop.f32.mrf.mxu0
    %v989 = vpop.f32.mrf.mxu0
    %v990 = vadd.f32 %v901, %v989
    %v991 = vpop.f32.mrf.mxu0
    %992 = vdwg.mxu0
    %v993 = vlaneseq
    %v994 = vshrl.u32 %v993, 7
    %v995 = vsub.s32 0, %v994
    %v996 = vrot.slane %v90, %v995
    %v997 = vadd.f32 %v987, %v996
    %v998 = vadd.f32 %v990, %v996
    %v999 = vmax.f32 %v997, 0.0
    %v1000 = vmax.f32 %v998, 0.0
    %v1001 = vpack.c.bf16 %v1000, %v999
    %v1002 = vld [vmem:[#allocation5 + $0xd0] sm:$0xf]
    %v1003 = vld [vmem:[#allocation5 + $0xd4] sm:$0xf]
    %v1004 = vld [vmem:[#allocation5 + $0xd8] sm:$0xf]
    %v1005 = vld [vmem:[#allocation5 + $0xdc] sm:$0xf]
    %v1006 = vld [vmem:[#allocation5 + $0xe0] sm:$0xf]
    %v1007 = vld [vmem:[#allocation5 + $0xe4] sm:$0xf]
    %v1008 = vld [vmem:[#allocation5 + $0xe8] sm:$0xf]
    %v1009 = vld [vmem:[#allocation5 + $0xec] sm:$0xf]
    %v1010 = vld [vmem:[#allocation5 + $0xf0] sm:$0xf]
    %v1011 = vld [vmem:[#allocation5 + $0xf4] sm:$0xf]
    %v1012 = vld [vmem:[#allocation5 + $0xf8] sm:$0xf]
    %v1013 = vld [vmem:[#allocation5 + $0xfc] sm:$0xf]
    %v1014 = vld [vmem:[#allocation5 + $0x100] sm:$0xf]
    %v1015 = vld [vmem:[#allocation5 + $0x104] sm:$0xf]
    %v1016 = vld [vmem:[#allocation5 + $0x108] sm:$0xf]
    %v1017 = vld [vmem:[#allocation5 + $0x10c] sm:$0xf]
    %v1018 = vlaneseq
    %v1019 = vshrl.u32 %v1018, 7
    %v1020 = vsub.s32 0, %v1019
    %v1021 = vrot.slane %v91, %v1020
    %v1038 = vunpack.c.l.b16 %v1002
    %v1039 = vunpack.c.l.b16 %v1003
    %v1040 = vunpack.c.l.b16 %v1004
    %v1041 = vunpack.c.l.b16 %v1005
    %v1042 = vunpack.c.l.b16 %v1006
    %v1043 = vunpack.c.l.b16 %v1007
    %v1044 = vunpack.c.l.b16 %v1008
    %v1045 = vunpack.c.l.b16 %v1009
    %v1046 = vunpack.c.l.b16 %v1010
    %v1047 = vunpack.c.l.b16 %v1011
    %v1048 = vunpack.c.l.b16 %v1012
    %v1049 = vunpack.c.l.b16 %v1013
    %v1050 = vunpack.c.l.b16 %v1014
    %v1051 = vunpack.c.l.b16 %v1015
    %v1052 = vunpack.c.l.b16 %v1016
    %v1053 = vunpack.c.l.b16 %v1017
    %v1054 = vpack.c.b16 %v1039, %v1038
    %v1055 = vpack.c.b16 %v1041, %v1040
    %v1056 = vpack.c.b16 %v1043, %v1042
    %v1057 = vpack.c.b16 %v1045, %v1044
    %v1058 = vpack.c.b16 %v1047, %v1046
    %v1059 = vpack.c.b16 %v1049, %v1048
    %v1060 = vpack.c.b16 %v1051, %v1050
    %v1061 = vpack.c.b16 %v1053, %v1052
    %1070 = vmatprep.subr.bf16.mxu0 0
    %1071 = vmatpush1.bf16.msra.mxu0 %v1061
    %1072 = vmatprep.subr.bf16.mxu0 0
    %1073 = vmatpush1.bf16.msra.mxu0 %v1060
    %1074 = vmatprep.subr.bf16.mxu0 0
    %1075 = vmatpush1.bf16.msra.mxu0 %v1059
    %1076 = vmatprep.subr.bf16.mxu0 0
    %1077 = vmatpush1.bf16.msra.mxu0 %v1058
    %1078 = vmatprep.subr.bf16.mxu0 0
    %1079 = vmatpush1.bf16.msra.mxu0 %v1057
    %1080 = vmatprep.subr.bf16.mxu0 0
    %1081 = vmatpush1.bf16.msra.mxu0 %v1056
    %1082 = vmatprep.subr.bf16.mxu0 0
    %1083 = vmatpush1.bf16.msra.mxu0 %v1055
    %1084 = vmatprep.subr.bf16.mxu0 0
    %1085 = vmatpush1.bf16.msra.mxu0 %v1054
    %1086 = vmatprep.subr.bf16.mxu0 0
    %1087 = vmatpush2.bf16.msra.mxu0 0
    %1088 = vmatprep.subr.bf16.mxu0 0
    %1089 = vmatpush2.bf16.msra.mxu0 0
    %1090 = vmatprep.subr.bf16.mxu0 0
    %1091 = vmatpush2.bf16.msra.mxu0 0
    %1092 = vmatprep.subr.bf16.mxu0 0
    %1093 = vmatpush2.bf16.msra.mxu0 0
    %1094 = vmatprep.subr.bf16.mxu0 0
    %1095 = vmatpush2.bf16.msra.mxu0 0
    %1096 = vmatprep.subr.bf16.mxu0 0
    %1097 = vmatpush2.bf16.msra.mxu0 0
    %1098 = vmatprep.subr.bf16.mxu0 0
    %1099 = vmatpush2.bf16.msra.mxu0 0
    %1100 = vmatprep.subr.bf16.mxu0 0
    %1101 = vmatpush2.bf16.msra.mxu0 0
    %1102 = vmatprep.mubr.bf16.mxu0 0
    %1103 = vmatmul.mubr.bf16.gmra.mxu0 %v1001
    %v1104 = vpop.f32.mrf.mxu0
    %v1105 = vadd.f32 %v1021, %v1104
    %v1106 = vpop.f32.mrf.mxu0
    %v1107 = vpop.f32.mrf.mxu0
    %v1108 = vadd.f32 %v1021, %v1107
    %v1109 = vpop.f32.mrf.mxu0
    %1110 = vdwg.mxu0
    %v1111 = vmax.f32 %v1105, 0.0
    %v1112 = vmax.f32 %v1108, 0.0
    %v1113 = vpack.c.bf16 %v1112, %v1111
    %v1114 = vld [vmem:[#allocation7] sm:$0xff]
    %v1115 = vld [vmem:[#allocation7 + $0x8] sm:$0xff]
    %v1116 = vld [vmem:[#allocation7 + $0x10] sm:$0xff]
    %v1117 = vld [vmem:[#allocation7 + $0x18] sm:$0xff]
    %v1118 = vld [vmem:[#allocation7 + $0x20] sm:$0xff]
    %v1119 = vld [vmem:[#allocation7 + $0x28] sm:$0xff]
    %v1120 = vld [vmem:[#allocation7 + $0x30] sm:$0xff]
    %v1121 = vld [vmem:[#allocation7 + $0x38] sm:$0xff]
    %v1122 = vld [vmem:[#allocation7 + $0x40] sm:$0xff]
    %v1123 = vld [vmem:[#allocation7 + $0x48] sm:$0xff]
    %v1124 = vld [vmem:[#allocation7 + $0x50] sm:$0xff]
    %v1125 = vld [vmem:[#allocation7 + $0x58] sm:$0xff]
    %v1126 = vld [vmem:[#allocation7 + $0x60] sm:$0xff]
    %v1127 = vld [vmem:[#allocation7 + $0x68] sm:$0xff]
    %v1128 = vld [vmem:[#allocation7 + $0x70] sm:$0xff]
    %v1129 = vld [vmem:[#allocation7 + $0x78] sm:$0xff]
    %v1130 = vld [vmem:[#allocation7 + $0x80] sm:$0xff]
    %v1131 = vld [vmem:[#allocation7 + $0x88] sm:$0xff]
    %v1132 = vld [vmem:[#allocation7 + $0x90] sm:$0xff]
    %v1133 = vld [vmem:[#allocation7 + $0x98] sm:$0xff]
    %v1134 = vld [vmem:[#allocation7 + $0xa0] sm:$0xff]
    %v1135 = vld [vmem:[#allocation7 + $0xa8] sm:$0xff]
    %v1136 = vld [vmem:[#allocation7 + $0xb0] sm:$0xff]
    %v1137 = vld [vmem:[#allocation7 + $0xb8] sm:$0xff]
    %v1138 = vld [vmem:[#allocation7 + $0xc0] sm:$0xff]
    %v1139 = vld [vmem:[#allocation7 + $0xc8] sm:$0xff]
    %v1140 = vld [vmem:[#allocation7 + $0xd0] sm:$0xff]
    %v1141 = vld [vmem:[#allocation7 + $0xd8] sm:$0xff]
    %v1142 = vld [vmem:[#allocation7 + $0xe0] sm:$0xff]
    %v1143 = vld [vmem:[#allocation7 + $0xe8] sm:$0xff]
    %v1144 = vld [vmem:[#allocation7 + $0xf0] sm:$0xff]
    %v1145 = vld [vmem:[#allocation7 + $0xf8] sm:$0xff]
    %s1146 = scalar_lea.vmem [#allocation7], 256
    %v1147 = vld [vmem:[%s1146] sm:$0xff]
    %v1148 = vld [vmem:[%s1146 + $0x8] sm:$0xff]
    %v1149 = vld [vmem:[%s1146 + $0x10] sm:$0xff]
    %v1150 = vld [vmem:[%s1146 + $0x18] sm:$0xff]
    %v1151 = vld [vmem:[%s1146 + $0x20] sm:$0xff]
    %v1152 = vld [vmem:[%s1146 + $0x28] sm:$0xff]
    %v1153 = vld [vmem:[%s1146 + $0x30] sm:$0xff]
    %v1154 = vld [vmem:[%s1146 + $0x38] sm:$0xff]
    %v1155 = vld [vmem:[%s1146 + $0x40] sm:$0xff]
    %v1156 = vld [vmem:[%s1146 + $0x48] sm:$0xff]
    %v1157 = vld [vmem:[%s1146 + $0x50] sm:$0xff]
    %v1158 = vld [vmem:[%s1146 + $0x58] sm:$0xff]
    %v1159 = vld [vmem:[%s1146 + $0x60] sm:$0xff]
    %v1160 = vld [vmem:[%s1146 + $0x68] sm:$0xff]
    %v1161 = vld [vmem:[%s1146 + $0x70] sm:$0xff]
    %v1162 = vld [vmem:[%s1146 + $0x78] sm:$0xff]
    %v1163 = vld [vmem:[%s1146 + $0x80] sm:$0xff]
    %v1164 = vld [vmem:[%s1146 + $0x88] sm:$0xff]
    %v1165 = vld [vmem:[%s1146 + $0x90] sm:$0xff]
    %v1166 = vld [vmem:[%s1146 + $0x98] sm:$0xff]
    %v1167 = vld [vmem:[%s1146 + $0xa0] sm:$0xff]
    %v1168 = vld [vmem:[%s1146 + $0xa8] sm:$0xff]
    %v1169 = vld [vmem:[%s1146 + $0xb0] sm:$0xff]
    %v1170 = vld [vmem:[%s1146 + $0xb8] sm:$0xff]
    %v1171 = vld [vmem:[%s1146 + $0xc0] sm:$0xff]
    %v1172 = vld [vmem:[%s1146 + $0xc8] sm:$0xff]
    %v1173 = vld [vmem:[%s1146 + $0xd0] sm:$0xff]
    %v1174 = vld [vmem:[%s1146 + $0xd8] sm:$0xff]
    %v1175 = vld [vmem:[%s1146 + $0xe0] sm:$0xff]
    %v1176 = vld [vmem:[%s1146 + $0xe8] sm:$0xff]
    %v1177 = vld [vmem:[%s1146 + $0xf0] sm:$0xff]
    %v1178 = vld [vmem:[%s1146 + $0xf8] sm:$0xff]
    %v1211 = vunpack.c.l.b16 %v1147
    %v1212 = vunpack.c.h.b16 %v1147
    %v1213 = vunpack.c.l.b16 %v1148
    %v1214 = vunpack.c.h.b16 %v1148
    %v1215 = vunpack.c.l.b16 %v1149
    %v1216 = vunpack.c.h.b16 %v1149
    %v1217 = vunpack.c.l.b16 %v1150
    %v1218 = vunpack.c.h.b16 %v1150
    %v1219 = vunpack.c.l.b16 %v1151
    %v1220 = vunpack.c.h.b16 %v1151
    %v1221 = vunpack.c.l.b16 %v1152
    %v1222 = vunpack.c.h.b16 %v1152
    %v1223 = vunpack.c.l.b16 %v1153
    %v1224 = vunpack.c.h.b16 %v1153
    %v1225 = vunpack.c.l.b16 %v1154
    %v1226 = vunpack.c.h.b16 %v1154
    %v1227 = vunpack.c.l.b16 %v1155
    %v1228 = vunpack.c.h.b16 %v1155
    %v1229 = vunpack.c.l.b16 %v1156
    %v1230 = vunpack.c.h.b16 %v1156
    %v1231 = vunpack.c.l.b16 %v1157
    %v1232 = vunpack.c.h.b16 %v1157
    %v1233 = vunpack.c.l.b16 %v1158
    %v1234 = vunpack.c.h.b16 %v1158
    %v1235 = vunpack.c.l.b16 %v1159
    %v1236 = vunpack.c.h.b16 %v1159
    %v1237 = vunpack.c.l.b16 %v1160
    %v1238 = vunpack.c.h.b16 %v1160
    %v1239 = vunpack.c.l.b16 %v1161
    %v1240 = vunpack.c.h.b16 %v1161
    %v1241 = vunpack.c.l.b16 %v1162
    %v1242 = vunpack.c.h.b16 %v1162
    %v1243 = vunpack.c.l.b16 %v1163
    %v1244 = vunpack.c.h.b16 %v1163
    %v1245 = vunpack.c.l.b16 %v1164
    %v1246 = vunpack.c.h.b16 %v1164
    %v1247 = vunpack.c.l.b16 %v1165
    %v1248 = vunpack.c.h.b16 %v1165
    %v1249 = vunpack.c.l.b16 %v1166
    %v1250 = vunpack.c.h.b16 %v1166
    %v1251 = vunpack.c.l.b16 %v1167
    %v1252 = vunpack.c.h.b16 %v1167
    %v1253 = vunpack.c.l.b16 %v1168
    %v1254 = vunpack.c.h.b16 %v1168
    %v1255 = vunpack.c.l.b16 %v1169
    %v1256 = vunpack.c.h.b16 %v1169
    %v1257 = vunpack.c.l.b16 %v1170
    %v1258 = vunpack.c.h.b16 %v1170
    %v1259 = vunpack.c.l.b16 %v1171
    %v1260 = vunpack.c.h.b16 %v1171
    %v1261 = vunpack.c.l.b16 %v1172
    %v1262 = vunpack.c.h.b16 %v1172
    %v1263 = vunpack.c.l.b16 %v1173
    %v1264 = vunpack.c.h.b16 %v1173
    %v1265 = vunpack.c.l.b16 %v1174
    %v1266 = vunpack.c.h.b16 %v1174
    %v1267 = vunpack.c.l.b16 %v1175
    %v1268 = vunpack.c.h.b16 %v1175
    %v1269 = vunpack.c.l.b16 %v1176
    %v1270 = vunpack.c.h.b16 %v1176
    %v1271 = vunpack.c.l.b16 %v1177
    %v1272 = vunpack.c.h.b16 %v1177
    %v1273 = vunpack.c.l.b16 %v1178
    %v1274 = vunpack.c.h.b16 %v1178
    %v1275 = vpack.c.b16 %v1215, %v1211
    %v1276 = vpack.c.b16 %v1216, %v1212
    %v1277 = vpack.c.b16 %v1217, %v1213
    %v1278 = vpack.c.b16 %v1218, %v1214
    %v1279 = vpack.c.b16 %v1223, %v1219
    %v1280 = vpack.c.b16 %v1224, %v1220
    %v1281 = vpack.c.b16 %v1225, %v1221
    %v1282 = vpack.c.b16 %v1226, %v1222
    %v1283 = vpack.c.b16 %v1231, %v1227
    %v1284 = vpack.c.b16 %v1232, %v1228
    %v1285 = vpack.c.b16 %v1233, %v1229
    %v1286 = vpack.c.b16 %v1234, %v1230
    %v1287 = vpack.c.b16 %v1239, %v1235
    %v1288 = vpack.c.b16 %v1240, %v1236
    %v1289 = vpack.c.b16 %v1241, %v1237
    %v1290 = vpack.c.b16 %v1242, %v1238
    %v1291 = vpack.c.b16 %v1247, %v1243
    %v1292 = vpack.c.b16 %v1248, %v1244
    %v1293 = vpack.c.b16 %v1249, %v1245
    %v1294 = vpack.c.b16 %v1250, %v1246
    %v1295 = vpack.c.b16 %v1255, %v1251
    %v1296 = vpack.c.b16 %v1256, %v1252
    %v1297 = vpack.c.b16 %v1257, %v1253
    %v1298 = vpack.c.b16 %v1258, %v1254
    %v1299 = vpack.c.b16 %v1263, %v1259
    %v1300 = vpack.c.b16 %v1264, %v1260
    %v1301 = vpack.c.b16 %v1265, %v1261
    %v1302 = vpack.c.b16 %v1266, %v1262
    %v1303 = vpack.c.b16 %v1271, %v1267
    %v1304 = vpack.c.b16 %v1272, %v1268
    %v1305 = vpack.c.b16 %v1273, %v1269
    %v1306 = vpack.c.b16 %v1274, %v1270
    %1339 = vmatprep.subr.bf16.mxu0 %v1304
    %1340 = vmatpush1.bf16.msra.mxu0 %v1303
    %1341 = vmatprep.subr.bf16.mxu0 %v1300
    %1342 = vmatpush1.bf16.msra.mxu0 %v1299
    %1343 = vmatprep.subr.bf16.mxu0 %v1296
    %1344 = vmatpush1.bf16.msra.mxu0 %v1295
    %1345 = vmatprep.subr.bf16.mxu0 %v1292
    %1346 = vmatpush1.bf16.msra.mxu0 %v1291
    %1347 = vmatprep.subr.bf16.mxu0 %v1288
    %1348 = vmatpush1.bf16.msra.mxu0 %v1287
    %1349 = vmatprep.subr.bf16.mxu0 %v1284
    %1350 = vmatpush1.bf16.msra.mxu0 %v1283
    %1351 = vmatprep.subr.bf16.mxu0 %v1280
    %1352 = vmatpush1.bf16.msra.mxu0 %v1279
    %1353 = vmatprep.subr.bf16.mxu0 %v1276
    %1354 = vmatpush1.bf16.msra.mxu0 %v1275
    %1355 = vmatprep.subr.bf16.mxu0 0
    %1356 = vmatpush2.bf16.msra.mxu0 0
    %1357 = vmatprep.subr.bf16.mxu0 0
    %1358 = vmatpush2.bf16.msra.mxu0 0
    %1359 = vmatprep.subr.bf16.mxu0 0
    %1360 = vmatpush2.bf16.msra.mxu0 0
    %1361 = vmatprep.subr.bf16.mxu0 0
    %1362 = vmatpush2.bf16.msra.mxu0 0
    %1363 = vmatprep.subr.bf16.mxu0 0
    %1364 = vmatpush2.bf16.msra.mxu0 0
    %1365 = vmatprep.subr.bf16.mxu0 0
    %1366 = vmatpush2.bf16.msra.mxu0 0
    %1367 = vmatprep.subr.bf16.mxu0 0
    %1368 = vmatpush2.bf16.msra.mxu0 0
    %1369 = vmatprep.subr.bf16.mxu0 0
    %1370 = vmatpush2.bf16.msra.mxu0 0
    %1371 = vmatprep.mubr.bf16.mxu0 0
    %1372 = vmatmul.mubr.bf16.gmra.mxu0 %v84
    %v1373 = vpop.f32.mrf.mxu0
    %v1374 = vadd.f32 0.0, %v1373
    %v1375 = vpop.f32.mrf.mxu0
    %v1376 = vadd.f32 0.0, %v1375
    %v1377 = vpop.f32.mrf.mxu0
    %v1378 = vadd.f32 0.0, %v1377
    %v1379 = vpop.f32.mrf.mxu0
    %v1380 = vadd.f32 0.0, %v1379
    %1381 = vdwg.mxu0
    %1382 = vmatprep.subr.bf16.mxu0 %v1306
    %1383 = vmatpush1.bf16.msra.mxu0 %v1305
    %1384 = vmatprep.subr.bf16.mxu0 %v1302
    %1385 = vmatpush1.bf16.msra.mxu0 %v1301
    %1386 = vmatprep.subr.bf16.mxu0 %v1298
    %1387 = vmatpush1.bf16.msra.mxu0 %v1297
    %1388 = vmatprep.subr.bf16.mxu0 %v1294
    %1389 = vmatpush1.bf16.msra.mxu0 %v1293
    %1390 = vmatprep.subr.bf16.mxu0 %v1290
    %1391 = vmatpush1.bf16.msra.mxu0 %v1289
    %1392 = vmatprep.subr.bf16.mxu0 %v1286
    %1393 = vmatpush1.bf16.msra.mxu0 %v1285
    %1394 = vmatprep.subr.bf16.mxu0 %v1282
    %1395 = vmatpush1.bf16.msra.mxu0 %v1281
    %1396 = vmatprep.subr.bf16.mxu0 %v1278
    %1397 = vmatpush1.bf16.msra.mxu0 %v1277
    %1398 = vmatprep.subr.bf16.mxu0 0
    %1399 = vmatpush2.bf16.msra.mxu0 0
    %1400 = vmatprep.subr.bf16.mxu0 0
    %1401 = vmatpush2.bf16.msra.mxu0 0
    %1402 = vmatprep.subr.bf16.mxu0 0
    %1403 = vmatpush2.bf16.msra.mxu0 0
    %1404 = vmatprep.subr.bf16.mxu0 0
    %1405 = vmatpush2.bf16.msra.mxu0 0
    %1406 = vmatprep.subr.bf16.mxu0 0
    %1407 = vmatpush2.bf16.msra.mxu0 0
    %1408 = vmatprep.subr.bf16.mxu0 0
    %1409 = vmatpush2.bf16.msra.mxu0 0
    %1410 = vmatprep.subr.bf16.mxu0 0
    %1411 = vmatpush2.bf16.msra.mxu0 0
    %1412 = vmatprep.subr.bf16.mxu0 0
    %1413 = vmatpush2.bf16.msra.mxu0 0
    %1414 = vmatprep.mubr.bf16.mxu0 0
    %1415 = vmatmul.mubr.bf16.gmra.mxu0 %v84
    %v1416 = vpop.f32.mrf.mxu0
    %v1417 = vadd.f32 0.0, %v1416
    %v1418 = vpop.f32.mrf.mxu0
    %v1419 = vadd.f32 0.0, %v1418
    %v1420 = vpop.f32.mrf.mxu0
    %v1421 = vadd.f32 0.0, %v1420
    %v1422 = vpop.f32.mrf.mxu0
    %v1423 = vadd.f32 0.0, %v1422
    %1424 = vdwg.mxu0
    %v1457 = vunpack.c.l.b16 %v1114
    %v1458 = vunpack.c.h.b16 %v1114
    %v1459 = vunpack.c.l.b16 %v1115
    %v1460 = vunpack.c.h.b16 %v1115
    %v1461 = vunpack.c.l.b16 %v1116
    %v1462 = vunpack.c.h.b16 %v1116
    %v1463 = vunpack.c.l.b16 %v1117
    %v1464 = vunpack.c.h.b16 %v1117
    %v1465 = vunpack.c.l.b16 %v1118
    %v1466 = vunpack.c.h.b16 %v1118
    %v1467 = vunpack.c.l.b16 %v1119
    %v1468 = vunpack.c.h.b16 %v1119
    %v1469 = vunpack.c.l.b16 %v1120
    %v1470 = vunpack.c.h.b16 %v1120
    %v1471 = vunpack.c.l.b16 %v1121
    %v1472 = vunpack.c.h.b16 %v1121
    %v1473 = vunpack.c.l.b16 %v1122
    %v1474 = vunpack.c.h.b16 %v1122
    %v1475 = vunpack.c.l.b16 %v1123
    %v1476 = vunpack.c.h.b16 %v1123
    %v1477 = vunpack.c.l.b16 %v1124
    %v1478 = vunpack.c.h.b16 %v1124
    %v1479 = vunpack.c.l.b16 %v1125
    %v1480 = vunpack.c.h.b16 %v1125
    %v1481 = vunpack.c.l.b16 %v1126
    %v1482 = vunpack.c.h.b16 %v1126
    %v1483 = vunpack.c.l.b16 %v1127
    %v1484 = vunpack.c.h.b16 %v1127
    %v1485 = vunpack.c.l.b16 %v1128
    %v1486 = vunpack.c.h.b16 %v1128
    %v1487 = vunpack.c.l.b16 %v1129
    %v1488 = vunpack.c.h.b16 %v1129
    %v1489 = vunpack.c.l.b16 %v1130
    %v1490 = vunpack.c.h.b16 %v1130
    %v1491 = vunpack.c.l.b16 %v1131
    %v1492 = vunpack.c.h.b16 %v1131
    %v1493 = vunpack.c.l.b16 %v1132
    %v1494 = vunpack.c.h.b16 %v1132
    %v1495 = vunpack.c.l.b16 %v1133
    %v1496 = vunpack.c.h.b16 %v1133
    %v1497 = vunpack.c.l.b16 %v1134
    %v1498 = vunpack.c.h.b16 %v1134
    %v1499 = vunpack.c.l.b16 %v1135
    %v1500 = vunpack.c.h.b16 %v1135
    %v1501 = vunpack.c.l.b16 %v1136
    %v1502 = vunpack.c.h.b16 %v1136
    %v1503 = vunpack.c.l.b16 %v1137
    %v1504 = vunpack.c.h.b16 %v1137
    %v1505 = vunpack.c.l.b16 %v1138
    %v1506 = vunpack.c.h.b16 %v1138
    %v1507 = vunpack.c.l.b16 %v1139
    %v1508 = vunpack.c.h.b16 %v1139
    %v1509 = vunpack.c.l.b16 %v1140
    %v1510 = vunpack.c.h.b16 %v1140
    %v1511 = vunpack.c.l.b16 %v1141
    %v1512 = vunpack.c.h.b16 %v1141
    %v1513 = vunpack.c.l.b16 %v1142
    %v1514 = vunpack.c.h.b16 %v1142
    %v1515 = vunpack.c.l.b16 %v1143
    %v1516 = vunpack.c.h.b16 %v1143
    %v1517 = vunpack.c.l.b16 %v1144
    %v1518 = vunpack.c.h.b16 %v1144
    %v1519 = vunpack.c.l.b16 %v1145
    %v1520 = vunpack.c.h.b16 %v1145
    %v1521 = vpack.c.b16 %v1461, %v1457
    %v1522 = vpack.c.b16 %v1462, %v1458
    %v1523 = vpack.c.b16 %v1463, %v1459
    %v1524 = vpack.c.b16 %v1464, %v1460
    %v1525 = vpack.c.b16 %v1469, %v1465
    %v1526 = vpack.c.b16 %v1470, %v1466
    %v1527 = vpack.c.b16 %v1471, %v1467
    %v1528 = vpack.c.b16 %v1472, %v1468
    %v1529 = vpack.c.b16 %v1477, %v1473
    %v1530 = vpack.c.b16 %v1478, %v1474
    %v1531 = vpack.c.b16 %v1479, %v1475
    %v1532 = vpack.c.b16 %v1480, %v1476
    %v1533 = vpack.c.b16 %v1485, %v1481
    %v1534 = vpack.c.b16 %v1486, %v1482
    %v1535 = vpack.c.b16 %v1487, %v1483
    %v1536 = vpack.c.b16 %v1488, %v1484
    %v1537 = vpack.c.b16 %v1493, %v1489
    %v1538 = vpack.c.b16 %v1494, %v1490
    %v1539 = vpack.c.b16 %v1495, %v1491
    %v1540 = vpack.c.b16 %v1496, %v1492
    %v1541 = vpack.c.b16 %v1501, %v1497
    %v1542 = vpack.c.b16 %v1502, %v1498
    %v1543 = vpack.c.b16 %v1503, %v1499
    %v1544 = vpack.c.b16 %v1504, %v1500
    %v1545 = vpack.c.b16 %v1509, %v1505
    %v1546 = vpack.c.b16 %v1510, %v1506
    %v1547 = vpack.c.b16 %v1511, %v1507
    %v1548 = vpack.c.b16 %v1512, %v1508
    %v1549 = vpack.c.b16 %v1517, %v1513
    %v1550 = vpack.c.b16 %v1518, %v1514
    %v1551 = vpack.c.b16 %v1519, %v1515
    %v1552 = vpack.c.b16 %v1520, %v1516
    %1585 = vmatprep.subr.bf16.mxu0 %v1550
    %1586 = vmatpush1.bf16.msra.mxu0 %v1549
    %1587 = vmatprep.subr.bf16.mxu0 %v1546
    %1588 = vmatpush1.bf16.msra.mxu0 %v1545
    %1589 = vmatprep.subr.bf16.mxu0 %v1542
    %1590 = vmatpush1.bf16.msra.mxu0 %v1541
    %1591 = vmatprep.subr.bf16.mxu0 %v1538
    %1592 = vmatpush1.bf16.msra.mxu0 %v1537
    %1593 = vmatprep.subr.bf16.mxu0 %v1534
    %1594 = vmatpush1.bf16.msra.mxu0 %v1533
    %1595 = vmatprep.subr.bf16.mxu0 %v1530
    %1596 = vmatpush1.bf16.msra.mxu0 %v1529
    %1597 = vmatprep.subr.bf16.mxu0 %v1526
    %1598 = vmatpush1.bf16.msra.mxu0 %v1525
    %1599 = vmatprep.subr.bf16.mxu0 %v1522
    %1600 = vmatpush1.bf16.msra.mxu0 %v1521
    %1601 = vmatprep.subr.bf16.mxu0 0
    %1602 = vmatpush2.bf16.msra.mxu0 0
    %1603 = vmatprep.subr.bf16.mxu0 0
    %1604 = vmatpush2.bf16.msra.mxu0 0
    %1605 = vmatprep.subr.bf16.mxu0 0
    %1606 = vmatpush2.bf16.msra.mxu0 0
    %1607 = vmatprep.subr.bf16.mxu0 0
    %1608 = vmatpush2.bf16.msra.mxu0 0
    %1609 = vmatprep.subr.bf16.mxu0 0
    %1610 = vmatpush2.bf16.msra.mxu0 0
    %1611 = vmatprep.subr.bf16.mxu0 0
    %1612 = vmatpush2.bf16.msra.mxu0 0
    %1613 = vmatprep.subr.bf16.mxu0 0
    %1614 = vmatpush2.bf16.msra.mxu0 0
    %1615 = vmatprep.subr.bf16.mxu0 0
    %1616 = vmatpush2.bf16.msra.mxu0 0
    %1617 = vmatprep.mubr.bf16.mxu0 0
    %1618 = vmatmul.mubr.bf16.gmra.mxu0 %v1113
    %v1619 = vpop.f32.mrf.mxu0
    %v1620 = vadd.f32 %v1374, %v1619
    %v1621 = vpop.f32.mrf.mxu0
    %v1622 = vadd.f32 %v1376, %v1621
    %v1623 = vpop.f32.mrf.mxu0
    %v1624 = vadd.f32 %v1378, %v1623
    %v1625 = vpop.f32.mrf.mxu0
    %v1626 = vadd.f32 %v1380, %v1625
    %1627 = vdwg.mxu0
    %1628 = vmatprep.subr.bf16.mxu0 %v1552
    %1629 = vmatpush1.bf16.msra.mxu0 %v1551
    %1630 = vmatprep.subr.bf16.mxu0 %v1548
    %1631 = vmatpush1.bf16.msra.mxu0 %v1547
    %1632 = vmatprep.subr.bf16.mxu0 %v1544
    %1633 = vmatpush1.bf16.msra.mxu0 %v1543
    %1634 = vmatprep.subr.bf16.mxu0 %v1540
    %1635 = vmatpush1.bf16.msra.mxu0 %v1539
    %1636 = vmatprep.subr.bf16.mxu0 %v1536
    %1637 = vmatpush1.bf16.msra.mxu0 %v1535
    %1638 = vmatprep.subr.bf16.mxu0 %v1532
    %1639 = vmatpush1.bf16.msra.mxu0 %v1531
    %1640 = vmatprep.subr.bf16.mxu0 %v1528
    %1641 = vmatpush1.bf16.msra.mxu0 %v1527
    %1642 = vmatprep.subr.bf16.mxu0 %v1524
    %1643 = vmatpush1.bf16.msra.mxu0 %v1523
    %1644 = vmatprep.subr.bf16.mxu0 0
    %1645 = vmatpush2.bf16.msra.mxu0 0
    %1646 = vmatprep.subr.bf16.mxu0 0
    %1647 = vmatpush2.bf16.msra.mxu0 0
    %1648 = vmatprep.subr.bf16.mxu0 0
    %1649 = vmatpush2.bf16.msra.mxu0 0
    %1650 = vmatprep.subr.bf16.mxu0 0
    %1651 = vmatpush2.bf16.msra.mxu0 0
    %1652 = vmatprep.subr.bf16.mxu0 0
    %1653 = vmatpush2.bf16.msra.mxu0 0
    %1654 = vmatprep.subr.bf16.mxu0 0
    %1655 = vmatpush2.bf16.msra.mxu0 0
    %1656 = vmatprep.subr.bf16.mxu0 0
    %1657 = vmatpush2.bf16.msra.mxu0 0
    %1658 = vmatprep.subr.bf16.mxu0 0
    %1659 = vmatpush2.bf16.msra.mxu0 0
    %1660 = vmatprep.mubr.bf16.mxu0 0
    %1661 = vmatmul.mubr.bf16.gmra.mxu0 %v1113
    %v1662 = vpop.f32.mrf.mxu0
    %v1663 = vadd.f32 %v1417, %v1662
    %v1664 = vpop.f32.mrf.mxu0
    %v1665 = vadd.f32 %v1419, %v1664
    %v1666 = vpop.f32.mrf.mxu0
    %v1667 = vadd.f32 %v1421, %v1666
    %v1668 = vpop.f32.mrf.mxu0
    %v1669 = vadd.f32 %v1423, %v1668
    %1670 = vdwg.mxu0
    %v1671 = vlaneseq
    %v1672 = vshrl.u32 %v1671, 7
    %v1673 = vsub.s32 0, %v1672
    %v1674 = vrot.slane %v93, %v1673
    %v1675 = vadd.f32 %v1620, %v1674
    %v1676 = vadd.f32 %v1624, %v1674
    %v1677 = vxor.u32 %v1675, 2147483648
    %v1678 = vxor.u32 %v1676, 2147483648
    %v1679 = vmul.f32 %v1677, 1.442695
    %v1680 = vpow.pop %v1679
    %v1681 = vmul.f32 %v1678, 1.442695
    %v1682 = vpow.pop %v1681
    %v1683 = vadd.f32 %v1680, 1.0
    %v1684 = vadd.f32 %v1682, 1.0
    %v1685 = vrcp.pop %v1683
    %v1686 = vmul.f32 1.0, %v1685
    %v1687 = vrcp.pop %v1684
    %v1688 = vmul.f32 1.0, %v1687
    %v1689 = vlaneseq
    %v1690 = vshrl.u32 %v1689, 7
    %v1691 = vsub.s32 0, %v1690
    %v1692 = vrot.slane %v94, %v1691
    %v1693 = vadd.f32 %v1622, %v1692
    %v1694 = vadd.f32 %v1626, %v1692
    %v1695 = vxor.u32 %v1693, 2147483648
    %v1696 = vxor.u32 %v1694, 2147483648
    %v1697 = vmul.f32 %v1695, 1.442695
    %v1698 = vpow.pop %v1697
    %v1699 = vmul.f32 %v1696, 1.442695
    %v1700 = vpow.pop %v1699
    %v1701 = vadd.f32 %v1698, 1.0
    %v1702 = vadd.f32 %v1700, 1.0
    %v1703 = vrcp.pop %v1701
    %v1704 = vmul.f32 1.0, %v1703
    %v1705 = vrcp.pop %v1702
    %v1706 = vmul.f32 1.0, %v1705
    %v1707 = vlaneseq
    %v1708 = vshrl.u32 %v1707, 7
    %v1709 = vsub.s32 0, %v1708
    %v1710 = vrot.slane %v95, %v1709
    %v1711 = vadd.f32 %v1663, %v1710
    %v1712 = vadd.f32 %v1667, %v1710
    %v1713 = vtanh.pop %v1711
    %v1714 = vtanh.pop %v1712
    %v1715 = vlaneseq
    %v1716 = vshrl.u32 %v1715, 7
    %v1717 = vsub.s32 0, %v1716
    %v1718 = vrot.slane %v96, %v1717
    %v1719 = vadd.f32 %v1665, %v1718
    %v1720 = vadd.f32 %v1669, %v1718
    %v1721 = vxor.u32 %v1719, 2147483648
    %v1722 = vxor.u32 %v1720, 2147483648
    %v1723 = vmul.f32 %v1721, 1.442695
    %v1724 = vpow.pop %v1723
    %v1725 = vmul.f32 %v1722, 1.442695
    %v1726 = vpow.pop %v1725
    %v1727 = vadd.f32 %v1724, 1.0
    %v1728 = vadd.f32 %v1726, 1.0
    %v1729 = vrcp.pop %v1727
    %v1730 = vmul.f32 1.0, %v1729
    %v1731 = vrcp.pop %v1728
    %v1732 = vmul.f32 1.0, %v1731
    %v1733 = vmul.f32 %v1704, %v86
    %v1734 = vmul.f32 %v1706, %v87
    %v1735 = vmul.f32 %v1686, %v1713
    %v1736 = vmul.f32 %v1688, %v1714
    %v1737 = vadd.f32 %v1733, %v1735
    %v1738 = vadd.f32 %v1734, %v1736
    %v1739 = vtanh.pop %v1737
    %v1740 = vtanh.pop %v1738
    %v1741 = vmul.f32 %v1730, %v1739
    %v1742 = vmul.f32 %v1732, %v1740
    %v1743 = vmax.f32 %v200, 0.0
    %v1744 = vmax.f32 %v203, 0.0
    %v1745 = vpack.c.bf16 %v1744, %v1743
    %v1746 = vld [vmem:[#allocation5 + $0x110] sm:$0xf]
    %v1747 = vld [vmem:[#allocation5 + $0x114] sm:$0xf]
    %v1748 = vld [vmem:[#allocation5 + $0x118] sm:$0xf]
    %v1749 = vld [vmem:[#allocation5 + $0x11c] sm:$0xf]
    %v1750 = vlaneseq
    %v1751 = vshrl.u32 %v1750, 7
    %v1752 = vsub.s32 0, %v1751
    %v1753 = vrot.slane %v92, %v1752
    %1755 = vrot.lane.b32.xlu0 %v1745, 64
    %v1756 = vpop.permute.xlu0 %1755
    %v1761 = vunpack.c.l.b16 %v1746
    %v1762 = vunpack.c.l.b16 %v1747
    %v1763 = vunpack.c.l.b16 %v1748
    %v1764 = vunpack.c.l.b16 %v1749
    %v1765 = vpack.c.b16 %v1762, %v1761
    %v1766 = vpack.c.b16 %v1764, %v1763
    %v1770 = vsel %vm478, %v1756, 0
    %1772 = vmatprep.subr.bf16.mxu0 0
    %1773 = vmatpush1.bf16.msra.mxu0 0
    %1774 = vmatprep.subr.bf16.mxu0 0
    %1775 = vmatpush1.bf16.msra.mxu0 0
    %1776 = vmatprep.subr.bf16.mxu0 0
    %1777 = vmatpush1.bf16.msra.mxu0 0
    %1778 = vmatprep.subr.bf16.mxu0 0
    %1779 = vmatpush1.bf16.msra.mxu0 0
    %1780 = vmatprep.subr.bf16.mxu0 0
    %1781 = vmatpush1.bf16.msra.mxu0 0
    %1782 = vmatprep.subr.bf16.mxu0 0
    %1783 = vmatpush1.bf16.msra.mxu0 0
    %1784 = vmatprep.subr.bf16.mxu0 0
    %1785 = vmatpush1.bf16.msra.mxu0 %v1766
    %1786 = vmatprep.subr.bf16.mxu0 0
    %1787 = vmatpush1.bf16.msra.mxu0 %v1765
    %1788 = vmatprep.subr.bf16.mxu0 0
    %1789 = vmatpush2.bf16.msra.mxu0 0
    %1790 = vmatprep.subr.bf16.mxu0 0
    %1791 = vmatpush2.bf16.msra.mxu0 0
    %1792 = vmatprep.subr.bf16.mxu0 0
    %1793 = vmatpush2.bf16.msra.mxu0 0
    %1794 = vmatprep.subr.bf16.mxu0 0
    %1795 = vmatpush2.bf16.msra.mxu0 0
    %1796 = vmatprep.subr.bf16.mxu0 0
    %1797 = vmatpush2.bf16.msra.mxu0 0
    %1798 = vmatprep.subr.bf16.mxu0 0
    %1799 = vmatpush2.bf16.msra.mxu0 0
    %1800 = vmatprep.subr.bf16.mxu0 0
    %1801 = vmatpush2.bf16.msra.mxu0 0
    %1802 = vmatprep.subr.bf16.mxu0 0
    %1803 = vmatpush2.bf16.msra.mxu0 0
    %1804 = vmatprep.mubr.bf16.mxu0 0
    %1805 = vmatmul.mubr.bf16.gmra.mxu0 %v1770
    %v1806 = vpop.f32.mrf.mxu0
    %v1807 = vadd.f32 %v1753, %v1806
    %v1808 = vpop.f32.mrf.mxu0
    %v1809 = vpop.f32.mrf.mxu0
    %v1810 = vadd.f32 %v1753, %v1809
    %v1811 = vpop.f32.mrf.mxu0
    %1812 = vdwg.mxu0
    %v1813 = vmax.f32 %v1807, 0.0
    %v1814 = vmax.f32 %v1810, 0.0
    %1815 = vst [vmem:[#allocation10] sm:$0xff] %v1813
    %1816 = vst [vmem:[#allocation10 + $0x8] sm:$0xff] %v1814
    %s1817 = scalar_lea.vmem [#allocation10], 16
    %1818 = vst [vmem:[%s1817] sm:$0xff] %v1741
    %1819 = vst [vmem:[%s1817 + $0x8] sm:$0xff] %v1742
    %s1820 = scalar_lea.vmem [#allocation10], 32
    %1821 = vst [vmem:[%s1820] sm:$0xff] %v1737
    %1822 = vst [vmem:[%s1820 + $0x8] sm:$0xff] %v1738
    // Predicated region
    $region34: #{tpu_custom_call.1} parent=1 // pred_check
      _
    $region35: #{tpu_custom_call.1} parent=1 // pred_check_branch
      %1824 = sbr.rel (0) target = $region37
    $region36: #{tpu_custom_call.1} parent=1 // pred_region
      %s1826 = ssub.s32 768, 768
      %1827 = vsyncadd [#allocation4], %s1826
      %s1828 = sshll.u32 [#allocation10], 4
      %s1829 = int_to_ptr.vmem [resolvable:$true] %s1828
      %1834 = dma.vmem_to_hbm [thread:$0]  %s1829, 768, %s4, [#allocation4], 128, 128, 8
    $region37: #{tpu_custom_call.1} parent=1 // pred_fallthru
      _
    // Predicated region
    $region38: #{tpu_custom_call.1} parent=1 // pred_check
      _
    $region39: #{tpu_custom_call.1} parent=1 // pred_check_branch
      %1836 = sbr.rel (0) target = $region41
    $region40: #{tpu_custom_call.1} parent=1 // pred_region
      %1837 = dma.done [#allocation4], 768
    $region41: #{tpu_custom_call.1} parent=1 // pred_fallthru
      _
    %1838 = vsyncpa [#allocation3], 1
    %1839 = vsyncpa [#allocation6], 1
    %1840 = vsyncpa [#allocation9], 1
    %1841 = vsyncpa [#allocation4], 1

</llo_original>
